<compile_context>
chip_gen: v7x
topology: tpu7x:2x2x1
jax: 0.10.0
libtpu: 0.0.40
codegen_flags: <defaults>
</compile_context>

<pallas_src>
import functools

import jax
import jax.numpy as jnp
import numpy as np
from jax.experimental import pallas as pl
from jax.experimental.pallas import tpu as pltpu

HIDDEN = 32       # hparams['hidden_size']
NUM_HEAD = 1      # hparams['tech_attn_num_head']
BIN_TECH = 5      # hparams['binary_tech_num']
LN_EPS = 1e-5
TECH_TEMPERATURE = 1.0  # max(1e-7, hparams['tech_temperature'])
OUT_LANES = 128   # lane-dense output width (sliced back to BIN_TECH in the wrapper)


# ----------------------------- kernel helpers ------------------------------ #
def _layer_norm(x, g, b, eps=LN_EPS):
    # LayerNorm over channel dim (lanes); torch uses biased variance.
    mu = jnp.mean(x, axis=-1, keepdims=True)
    var = jnp.mean((x - mu) ** 2, axis=-1, keepdims=True)
    return (x - mu) * jax.lax.rsqrt(var + eps) * g + b


# --------------------------------- kernel ---------------------------------- #
def tech_predictor_kernel(ph_len_ref,                     # scalar prefetch (SMEM)
                          feat_ref, mel2ph_ref,
                          w_attn_ref, b_attn_ref,
                          ln1_g_ref, ln1_b_ref,
                          c1_w_ref, c1_b_ref,
                          c2_w_ref, c2_b_ref,
                          ln2_g_ref, ln2_b_ref,
                          post_w_ref, post_b_ref,
                          out_w_ref, out_b_ref,
                          o_ref, *, block_b, p_pad):
    Bt = block_b
    P = p_pad
    T = feat_ref.shape[1]
    H = feat_ref.shape[2]
    R = Bt * P
    ph_len = ph_len_ref[0]                                    # true ph_length (dynamic)

    feat3 = feat_ref[...]                                     # (Bt, T, H)
    feat2 = feat3.reshape(Bt * T, H)                          # leading-dim merge (free)
    mel2ph = mel2ph_ref[...]                                  # (Bt, 1, T) int32

    # attn = sigmoid(Linear(feat)); mean over heads — computed for all Bt*T rows at once
    attn = jax.nn.sigmoid(
        jnp.dot(feat2, w_attn_ref[...], preferred_element_type=jnp.float32)
        + b_attn_ref[...])                                    # (Bt*T, n_head)
    attn_mean = jnp.mean(attn, axis=-1, keepdims=True)        # (Bt*T, 1)
    attn_feat3 = (feat2 * attn_mean).reshape(Bt, T, H)        # (Bt, T, H)
    attn_mean3 = attn_mean.reshape(Bt, T, 1)                  # (Bt, T, 1)

    # scatter_add over phoneme index as a batched one-hot matmul (MXU friendly)
    ph_ids = jax.lax.broadcasted_iota(jnp.int32, (Bt, P, T), 1)
    onehot = (ph_ids == mel2ph).astype(jnp.float32)           # (Bt, P, T)
    ph_agg = jnp.einsum('bpt,bth->bph', onehot, attn_feat3,
                        preferred_element_type=jnp.float32)   # (Bt, P, H)
    denom = jnp.einsum('bpt,bto->bpo', onehot, attn_mean3,
                       preferred_element_type=jnp.float32)    # (Bt, P, 1)

    x = (ph_agg * pl.reciprocal(denom + 1e-5, approx=False)).reshape(R, H)

    # row masks (per padded-P block): emulate 'same' zero padding at the TRUE phoneme
    # boundary ph_len so padded rows never leak into valid rows.
    row_mod = jax.lax.broadcasted_iota(jnp.int32, (R, 1), 0) % P
    prev_keep = row_mod != 0                                  # row 0 of each sample
    next_keep = row_mod < (ph_len - 1)                        # last valid row & padding
    mask = (jnp.sum(jnp.abs(x), axis=-1, keepdims=True) > 0).astype(jnp.float32)

    def conv3(v, w3, b):
        # 'same' conv1d over phoneme rows, kernel size 3, via masked XLU rolls.
        v_prev = jnp.where(prev_keep, pltpu.roll(v, 1, axis=0), 0.0)       # v[p-1]
        v_next = jnp.where(next_keep, pltpu.roll(v, R - 1, axis=0), 0.0)   # v[p+1]
        y = jnp.dot(v_prev, w3[0], preferred_element_type=jnp.float32)
        y = y + jnp.dot(v, w3[1], preferred_element_type=jnp.float32)
        y = y + jnp.dot(v_next, w3[2], preferred_element_type=jnp.float32)
        return y + b

    # ---- tech_post: ConvBlocks(H, H, k=3, layers_in_block=1, c_multiple=1,
    #                             num_layers=1, post_net_kernel=3, act='swish', norm='ln')
    # ResidualBlock: LN -> Conv1d(k3) -> *3^-0.5 -> SiLU -> Conv1d(k1), residual, mask
    h = _layer_norm(x, ln1_g_ref[...], ln1_b_ref[...])
    h = conv3(h, c1_w_ref[...], c1_b_ref[...]) * (3.0 ** -0.5)
    h = h * jax.nn.sigmoid(h)                                 # SiLU / swish
    h = jnp.dot(h, c2_w_ref[...], preferred_element_type=jnp.float32) + c2_b_ref[...]
    x = (x + h) * mask

    # ConvBlocks tail: *nonpadding, last_norm*nonpadding, post_net1 (conv k=3)
    x = x * mask
    x = _layer_norm(x, ln2_g_ref[...], ln2_b_ref[...]) * mask
    x = conv3(x, post_w_ref[...], post_b_ref[...])            # (R, H)

    # binary_tech_out linear; 1/tech_temperature already folded into out_w/out_b,
    # and C is zero-padded to 128 lanes for unmasked stores.
    logits = (jnp.dot(x, out_w_ref[...], preferred_element_type=jnp.float32)
              + out_b_ref[...])                               # (R, 128)
    o_ref[...] = logits.reshape(Bt, P, out_w_ref.shape[1]).astype(o_ref.dtype)


# -------------------------------- wrapper ----------------------------------- #
def tech_predictor_forward(params, feat, ph_bd, tech_temperature=TECH_TEMPERATURE,
                           block_b=8):
    B, T, H = feat.shape
    ph_bd = ph_bd.astype(jnp.int32)
    mel2ph = jnp.cumsum(ph_bd, axis=1).astype(jnp.int32)          # (B, T)
    # mirrors `torch.max(torch.sum(ph_bd, 1)).item() + 1` (host sync, as in torch)
    ph_length = int(jnp.max(jnp.sum(ph_bd, axis=1))) + 1
    # sublane-aligned bucket: recompiles only per bucket, output block stays aligned
    p_pad = max(8, ((ph_length + 7) // 8) * 8)

    # batch elements per grid step (must divide B)
    Bt = min(block_b, B)
    while B % Bt:
        Bt -= 1

    nhead = params['w_attn'].shape[1]
    C = params['out_w'].shape[1]
    inv_t = 1.0 / max(1e-7, float(tech_temperature))
    out_w_pad = jnp.zeros((H, OUT_LANES), jnp.float32).at[:, :C].set(
        params['out_w'] * inv_t)
    out_b_pad = jnp.zeros((1, OUT_LANES), jnp.float32).at[:, :C].set(
        params['out_b'] * inv_t)

    mel2ph_in = mel2ph[:, None, :]                                # (B, 1, T)
    ph_len_arr = jnp.array([ph_length], jnp.int32)                # scalar prefetch

    kernel = functools.partial(tech_predictor_kernel, block_b=Bt, p_pad=p_pad)

    def rep(shape):
        n = len(shape)
        return pl.BlockSpec(shape, lambda g, plen, _n=n: (0,) * _n)

    grid_spec = pltpu.PrefetchScalarGridSpec(
        num_scalar_prefetch=1,
        grid=(B // Bt,),
        in_specs=[
            pl.BlockSpec((Bt, T, H), lambda g, plen: (g, 0, 0)),   # feat
            pl.BlockSpec((Bt, 1, T), lambda g, plen: (g, 0, 0)),   # mel2ph
            rep((H, nhead)), rep((1, nhead)),                      # attn linear
            rep((1, H)), rep((1, H)),                              # res-block LayerNorm
            rep((3, H, H)), rep((1, H)),                           # res-block conv k=3
            rep((H, H)), rep((1, H)),                              # res-block conv k=1
            rep((1, H)), rep((1, H)),                              # last_norm
            rep((3, H, H)), rep((1, H)),                           # post_net1 conv k=3
            rep((H, OUT_LANES)), rep((1, OUT_LANES)),              # binary_tech_out (padded)
        ],
        out_specs=pl.BlockSpec((Bt, p_pad, OUT_LANES), lambda g, plen: (g, 0, 0)),
    )

    out = pl.pallas_call(
        kernel,
        out_shape=jax.ShapeDtypeStruct((B, p_pad, OUT_LANES), jnp.float32),
        grid_spec=grid_spec,
        compiler_params=pltpu.CompilerParams(dimension_semantics=("parallel",)),
    )(ph_len_arr, feat, mel2ph_in,
      params['w_attn'], params['b_attn'],
      params['ln1_g'], params['ln1_b'],
      params['c1_w'], params['c1_b'],
      params['c2_w'], params['c2_b'],
      params['ln2_g'], params['ln2_b'],
      params['post_w'], params['post_b'],
      out_w_pad, out_b_pad)

    return out[:, :ph_length, :C]


# ------------------------ deterministic parameter init ---------------------- #
def init_params(key, hidden=HIDDEN, nhead=NUM_HEAD, nout=BIN_TECH):
    ks = jax.random.split(key, 8)

    def dense(k, fan_in, shape):            # kaiming/xavier-ish scale, deterministic
        return (jax.random.normal(k, shape, jnp.float32) * (2.0 / fan_in) ** 0.5)

    return dict(
        w_attn=dense(ks[0], hidden, (hidden, nhead)),
        b_attn=jnp.zeros((1, nhead), jnp.float32),
        ln1_g=jnp.ones((1, hidden), jnp.float32),
        ln1_b=jnp.zeros((1, hidden), jnp.float32),
        c1_w=dense(ks[1], hidden * 3, (3, hidden, hidden)),   # c1_w[k] == torch_w[:,:,k].T
        c1_b=jax.random.normal(ks[2], (1, hidden), jnp.float32) * 0.02,
        c2_w=dense(ks[3], hidden, (hidden, hidden)),          # torch_w[:,:,0].T
        c2_b=jax.random.normal(ks[4], (1, hidden), jnp.float32) * 0.02,
        ln2_g=jnp.ones((1, hidden), jnp.float32),
        ln2_b=jnp.zeros((1, hidden), jnp.float32),
        post_w=dense(ks[5], hidden * 3, (3, hidden, hidden)),
        post_b=jax.random.normal(ks[6], (1, hidden), jnp.float32) * 0.02,
        out_w=dense(ks[7], hidden, (hidden, nout)),
        out_b=jnp.zeros((1, nout), jnp.float32),
    )


# ----------------------------- pure-JAX reference --------------------------- #
def reference_forward(params, feat, ph_bd, tech_temperature=TECH_TEMPERATURE):
    B, T, H = feat.shape
    attn = jax.nn.sigmoid(feat @ params['w_attn'] + params['b_attn'])       # (B,T,nh)
    attn_feat = jnp.mean(feat[..., None] * attn[:, :, None, :], axis=-1)    # (B,T,H)
    mel2ph = jnp.cumsum(ph_bd.astype(jnp.int32), axis=1)
    P = int(jnp.max(jnp.sum(ph_bd, axis=1))) + 1
    attn_m = jnp.mean(attn, axis=-1)                                        # (B,T)
    b_idx = jnp.broadcast_to(jnp.arange(B)[:, None], (B, T))
    denom = jnp.zeros((B, P), jnp.float32).at[b_idx, mel2ph].add(attn_m)
    ph_agg = jnp.zeros((B, P, H), jnp.float32).at[b_idx, mel2ph].add(attn_feat)
    x = ph_agg / (denom[..., None] + 1e-5)
    mask = (jnp.sum(jnp.abs(x), axis=-1, keepdims=True) > 0).astype(jnp.float32)

    def ln(v, g, b):
        mu = jnp.mean(v, -1, keepdims=True)
        var = jnp.mean((v - mu) ** 2, -1, keepdims=True)
        return (v - mu) * jax.lax.rsqrt(var + LN_EPS) * g + b

    def conv3(v, w3, b):
        vp = jnp.pad(v, ((0, 0), (1, 1), (0, 0)))
        return vp[:, 0:P] @ w3[0] + vp[:, 1:P + 1] @ w3[1] + vp[:, 2:P + 2] @ w3[2] + b

    h = ln(x, params['ln1_g'], params['ln1_b'])
    h = conv3(h, params['c1_w'], params['c1_b']) * (3.0 ** -0.5)
    h = h * jax.nn.sigmoid(h)
    h = h @ params['c2_w'] + params['c2_b']
    x = (x + h) * mask
    x = x * mask
    x = ln(x, params['ln2_g'], params['ln2_b']) * mask
    x = conv3(x, params['post_w'], params['post_b'])
    return (x @ params['out_w'] + params['out_b']) / tech_temperature


# ----------------------------------- main ----------------------------------- #
if __name__ == "__main__":
    key = jax.random.PRNGKey(0)
    k_feat, k_bd, k_param = jax.random.split(key, 3)

    B, T, H = 2, 16, HIDDEN
    feat = jax.random.normal(k_feat, (B, T, H), jnp.float32)
    ph_bd = jax.random.bernoulli(k_bd, 0.3, (B, T)).astype(jnp.int32)   # phoneme boundaries

    params = init_params(k_param)

    tech_logits = tech_predictor_forward(params, feat, ph_bd)
    tech_logits = jax.block_until_ready(tech_logits)

    ref = reference_forward(params, feat, ph_bd)
    np.testing.assert_allclose(np.asarray(tech_logits), np.asarray(ref),
                               rtol=1e-3, atol=1e-3)

    # TODO(synk): dropout is a no-op here (eval mode / dropout=0.0 in hparams).
    print("KERNEL_OK")
</pallas_src>

<mosaic_0001>
module attributes {stable_mosaic.version = 11 : i64} {
  func.func @tech_predictor_kernel(%arg0: i32, %arg1: memref<1xi32, #tpu.memory_space<smem>>, %arg2: memref<2x16x32xf32, #tpu.memory_space<vmem>>, %arg3: memref<2x1x16xi32, #tpu.memory_space<vmem>>, %arg4: memref<32x1xf32, #tpu.memory_space<vmem>>, %arg5: memref<1x1xf32, #tpu.memory_space<vmem>>, %arg6: memref<1x32xf32, #tpu.memory_space<vmem>>, %arg7: memref<1x32xf32, #tpu.memory_space<vmem>>, %arg8: memref<3x32x32xf32, #tpu.memory_space<vmem>>, %arg9: memref<1x32xf32, #tpu.memory_space<vmem>>, %arg10: memref<32x32xf32, #tpu.memory_space<vmem>>, %arg11: memref<1x32xf32, #tpu.memory_space<vmem>>, %arg12: memref<1x32xf32, #tpu.memory_space<vmem>>, %arg13: memref<1x32xf32, #tpu.memory_space<vmem>>, %arg14: memref<3x32x32xf32, #tpu.memory_space<vmem>>, %arg15: memref<1x32xf32, #tpu.memory_space<vmem>>, %arg16: memref<32x128xf32, #tpu.memory_space<vmem>>, %arg17: memref<1x128xf32, #tpu.memory_space<vmem>>, %arg18: memref<2x16x128xf32, #tpu.memory_space<vmem>>) attributes {dimension_semantics = [#tpu.dimension_semantics<parallel>], iteration_bounds = array<i64: 1>, scalar_prefetch = 1 : i64, scratch_operands = 0 : i64, tpu.core_type = #tpu.core_type<tc>, window_params = [{transform_indices = @transform_0, window_bounds = array<i64: 2, 16, 32>}, {transform_indices = @transform_1, window_bounds = array<i64: 2, 1, 16>}, {pipeline_mode = #tpu.pipeline_mode<synchronous>, transform_indices = @transform_2, window_bounds = array<i64: 32, 1>}, {pipeline_mode = #tpu.pipeline_mode<synchronous>, transform_indices = @transform_3, window_bounds = array<i64: 1, 1>}, {pipeline_mode = #tpu.pipeline_mode<synchronous>, transform_indices = @transform_4, window_bounds = array<i64: 1, 32>}, {pipeline_mode = #tpu.pipeline_mode<synchronous>, transform_indices = @transform_5, window_bounds = array<i64: 1, 32>}, {pipeline_mode = #tpu.pipeline_mode<synchronous>, transform_indices = @transform_6, window_bounds = array<i64: 3, 32, 32>}, {pipeline_mode = #tpu.pipeline_mode<synchronous>, transform_indices = @transform_7, window_bounds = array<i64: 1, 32>}, {pipeline_mode = #tpu.pipeline_mode<synchronous>, transform_indices = @transform_8, window_bounds = array<i64: 32, 32>}, {pipeline_mode = #tpu.pipeline_mode<synchronous>, transform_indices = @transform_9, window_bounds = array<i64: 1, 32>}, {pipeline_mode = #tpu.pipeline_mode<synchronous>, transform_indices = @transform_10, window_bounds = array<i64: 1, 32>}, {pipeline_mode = #tpu.pipeline_mode<synchronous>, transform_indices = @transform_11, window_bounds = array<i64: 1, 32>}, {pipeline_mode = #tpu.pipeline_mode<synchronous>, transform_indices = @transform_12, window_bounds = array<i64: 3, 32, 32>}, {pipeline_mode = #tpu.pipeline_mode<synchronous>, transform_indices = @transform_13, window_bounds = array<i64: 1, 32>}, {pipeline_mode = #tpu.pipeline_mode<synchronous>, transform_indices = @transform_14, window_bounds = array<i64: 32, 128>}, {pipeline_mode = #tpu.pipeline_mode<synchronous>, transform_indices = @transform_15, window_bounds = array<i64: 1, 128>}, {transform_indices = @transform_16, window_bounds = array<i64: 2, 16, 128>}]} {
    %c0 = arith.constant 0 : index
    %0 = memref.load %arg1[%c0] : memref<1xi32, #tpu.memory_space<smem>>
    %c0_0 = arith.constant 0 : index
    %c0_1 = arith.constant 0 : index
    %c0_2 = arith.constant 0 : index
    %1 = vector.load %arg2[%c0_0, %c0_1, %c0_2] : memref<2x16x32xf32, #tpu.memory_space<vmem>>, vector<2x16x32xf32>
    %2 = vector.shape_cast %1 : vector<2x16x32xf32> to vector<32x32xf32>
    %c0_3 = arith.constant 0 : index
    %c0_4 = arith.constant 0 : index
    %c0_5 = arith.constant 0 : index
    %3 = vector.load %arg3[%c0_3, %c0_4, %c0_5] : memref<2x1x16xi32, #tpu.memory_space<vmem>>, vector<2x1x16xi32>
    %c0_6 = arith.constant 0 : index
    %c0_7 = arith.constant 0 : index
    %4 = vector.load %arg4[%c0_6, %c0_7] : memref<32x1xf32, #tpu.memory_space<vmem>>, vector<32x1xf32>
    %cst = arith.constant dense<0.000000e+00> : vector<32x1xf32>
    %5 = tpu.matmul %2, %4, %cst {dimension_numbers = #tpu.dot_dimension_numbers<[1], [0], [0], [1], [0, 0, 1, 1], [], []>} : vector<32x32xf32>, vector<32x1xf32>, vector<32x1xf32> -> vector<32x1xf32>
    %c0_8 = arith.constant 0 : index
    %c0_9 = arith.constant 0 : index
    %6 = vector.load %arg5[%c0_8, %c0_9] : memref<1x1xf32, #tpu.memory_space<vmem>>, vector<1x1xf32>
    %7 = vector.broadcast %6 : vector<1x1xf32> to vector<32x1xf32>
    %8 = arith.addf %5, %7 : vector<32x1xf32>
    %9 = arith.negf %8 : vector<32x1xf32>
    %10 = math.exp %9 : vector<32x1xf32>
    %cst_10 = arith.constant 1.000000e+00 : f32
    %11 = vector.broadcast %cst_10 : f32 to vector<32x1xf32>
    %12 = arith.addf %11, %10 : vector<32x1xf32>
    %13 = arith.divf %11, %12 : vector<32x1xf32>
    %cst_11 = arith.constant dense<0.000000e+00> : vector<32xf32>
    %14 = vector.multi_reduction <add>, %13, %cst_11 [1] : vector<32x1xf32> to vector<32xf32>
    %15 = vector.shape_cast %14 : vector<32xf32> to vector<32x1xf32>
    %cst_12 = arith.constant 1.000000e+00 : f32
    %16 = vector.broadcast %cst_12 : f32 to vector<32x1xf32>
    %17 = arith.divf %15, %16 : vector<32x1xf32>
    %18 = vector.broadcast %17 : vector<32x1xf32> to vector<32x32xf32>
    %19 = arith.mulf %2, %18 : vector<32x32xf32>
    %20 = vector.shape_cast %19 : vector<32x32xf32> to vector<2x16x32xf32>
    %21 = vector.shape_cast %17 : vector<32x1xf32> to vector<2x16x1xf32>
    %22 = tpu.iota {dimensions = array<i32: 1>} : vector<2x16x16xi32>
    %23 = vector.broadcast %3 : vector<2x1x16xi32> to vector<2x16x16xi32>
    %24 = arith.cmpi eq, %22, %23 : vector<2x16x16xi32>
    %25 = arith.extui %24 : vector<2x16x16xi1> to vector<2x16x16xi32>
    %26 = arith.sitofp %25 : vector<2x16x16xi32> to vector<2x16x16xf32>
    "tpu.trace_start"() <{level = 10 : i32, message = "bpt,bth->bph"}> : () -> ()
    %cst_13 = arith.constant dense<0.000000e+00> : vector<2x16x32xf32>
    %27 = tpu.matmul %26, %20, %cst_13 {dimension_numbers = #tpu.dot_dimension_numbers<[2], [1], [1], [2], [0, 0, 0, 1, 1, 2], [0], [0]>} : vector<2x16x16xf32>, vector<2x16x32xf32>, vector<2x16x32xf32> -> vector<2x16x32xf32>
    "tpu.trace_stop"() : () -> ()
    "tpu.trace_start"() <{level = 10 : i32, message = "bpt,bto->bpo"}> : () -> ()
    %cst_14 = arith.constant dense<0.000000e+00> : vector<2x16x1xf32>
    %28 = tpu.matmul %26, %21, %cst_14 {dimension_numbers = #tpu.dot_dimension_numbers<[2], [1], [1], [2], [0, 0, 0, 1, 1, 2], [0], [0]>} : vector<2x16x16xf32>, vector<2x16x1xf32>, vector<2x16x1xf32> -> vector<2x16x1xf32>
    "tpu.trace_stop"() : () -> ()
    %cst_15 = arith.constant 9.99999974E-6 : f32
    %29 = vector.broadcast %cst_15 : f32 to vector<2x16x1xf32>
    %30 = arith.addf %28, %29 : vector<2x16x1xf32>
    %31 = tpu.reciprocal %30 : vector<2x16x1xf32> -> vector<2x16x1xf32>
    %32 = vector.broadcast %31 : vector<2x16x1xf32> to vector<2x16x32xf32>
    %33 = arith.mulf %27, %32 : vector<2x16x32xf32>
    %34 = vector.shape_cast %33 : vector<2x16x32xf32> to vector<32x32xf32>
    %35 = tpu.iota {dimensions = array<i32: 0>} : vector<32x1xi32>
    %c16_i32 = arith.constant 16 : i32
    %c0_i32 = arith.constant 0 : i32
    %36 = arith.cmpi eq, %c16_i32, %c0_i32 : i32
    %c1_i32 = arith.constant 1 : i32
    %37 = arith.select %36, %c1_i32, %c16_i32 : i32
    %38 = vector.broadcast %37 : i32 to vector<32x1xi32>
    %39 = arith.remsi %35, %38 : vector<32x1xi32>
    %c0_i32_16 = arith.constant 0 : i32
    %40 = vector.broadcast %c0_i32_16 : i32 to vector<32x1xi32>
    %41 = arith.cmpi ne, %39, %40 : vector<32x1xi32>
    %c0_i32_17 = arith.constant 0 : i32
    %42 = vector.broadcast %c0_i32_17 : i32 to vector<32x1xi32>
    %43 = arith.cmpi slt, %39, %42 : vector<32x1xi32>
    %c0_i32_18 = arith.constant 0 : i32
    %44 = arith.cmpi slt, %37, %c0_i32_18 : i32
    %45 = vector.broadcast %44 : i1 to vector<32x1xi1>
    %46 = vector.broadcast %45 : vector<32x1xi1> to vector<32x1xi1>
    %47 = arith.xori %43, %46 : vector<32x1xi1>
    %48 = arith.andi %47, %41 : vector<32x1xi1>
    %49 = vector.broadcast %37 : i32 to vector<32x1xi32>
    %50 = arith.addi %39, %49 : vector<32x1xi32>
    %51 = arith.select %48, %50, %39 : vector<32x1xi1>, vector<32x1xi32>
    %c0_i32_19 = arith.constant 0 : i32
    %52 = vector.broadcast %c0_i32_19 : i32 to vector<32x1xi32>
    %53 = arith.cmpi ne, %51, %52 : vector<32x1xi32>
    %c1_i32_20 = arith.constant 1 : i32
    %54 = arith.subi %0, %c1_i32_20 : i32
    %55 = vector.broadcast %54 : i32 to vector<32x1xi32>
    %56 = arith.cmpi slt, %51, %55 : vector<32x1xi32>
    %57 = math.absf %34 : vector<32x32xf32>
    %cst_21 = arith.constant dense<0.000000e+00> : vector<32xf32>
    %58 = vector.multi_reduction <add>, %57, %cst_21 [1] : vector<32x32xf32> to vector<32xf32>
    %59 = vector.shape_cast %58 : vector<32xf32> to vector<32x1xf32>
    %cst_22 = arith.constant 0.000000e+00 : f32
    %60 = vector.broadcast %cst_22 : f32 to vector<32x1xf32>
    %61 = arith.cmpf ogt, %59, %60 : vector<32x1xf32>
    %62 = arith.extui %61 : vector<32x1xi1> to vector<32x1xi32>
    %63 = arith.sitofp %62 : vector<32x1xi32> to vector<32x1xf32>
    %c0_23 = arith.constant 0 : index
    %c0_24 = arith.constant 0 : index
    %64 = vector.load %arg6[%c0_23, %c0_24] : memref<1x32xf32, #tpu.memory_space<vmem>>, vector<1x32xf32>
    %c0_25 = arith.constant 0 : index
    %c0_26 = arith.constant 0 : index
    %65 = vector.load %arg7[%c0_25, %c0_26] : memref<1x32xf32, #tpu.memory_space<vmem>>, vector<1x32xf32>
    %cst_27 = arith.constant dense<0.000000e+00> : vector<32xf32>
    %66 = vector.multi_reduction <add>, %34, %cst_27 [1] : vector<32x32xf32> to vector<32xf32>
    %67 = vector.shape_cast %66 : vector<32xf32> to vector<32x1xf32>
    %cst_28 = arith.constant 3.200000e+01 : f32
    %68 = vector.broadcast %cst_28 : f32 to vector<32x1xf32>
    %69 = arith.divf %67, %68 : vector<32x1xf32>
    %70 = vector.broadcast %69 : vector<32x1xf32> to vector<32x32xf32>
    %71 = arith.subf %34, %70 : vector<32x32xf32>
    %72 = arith.mulf %71, %71 : vector<32x32xf32>
    %cst_29 = arith.constant dense<0.000000e+00> : vector<32xf32>
    %73 = vector.multi_reduction <add>, %72, %cst_29 [1] : vector<32x32xf32> to vector<32xf32>
    %74 = vector.shape_cast %73 : vector<32xf32> to vector<32x1xf32>
    %cst_30 = arith.constant 3.200000e+01 : f32
    %75 = vector.broadcast %cst_30 : f32 to vector<32x1xf32>
    %76 = arith.divf %74, %75 : vector<32x1xf32>
    %77 = vector.broadcast %69 : vector<32x1xf32> to vector<32x32xf32>
    %78 = arith.subf %34, %77 : vector<32x32xf32>
    %cst_31 = arith.constant 9.99999974E-6 : f32
    %79 = vector.broadcast %cst_31 : f32 to vector<32x1xf32>
    %80 = arith.addf %76, %79 : vector<32x1xf32>
    %81 = math.rsqrt %80 : vector<32x1xf32>
    %82 = vector.broadcast %81 : vector<32x1xf32> to vector<32x32xf32>
    %83 = arith.mulf %78, %82 : vector<32x32xf32>
    %84 = vector.broadcast %64 : vector<1x32xf32> to vector<32x32xf32>
    %85 = arith.mulf %83, %84 : vector<32x32xf32>
    %86 = vector.broadcast %65 : vector<1x32xf32> to vector<32x32xf32>
    %87 = arith.addf %85, %86 : vector<32x32xf32>
    %c0_32 = arith.constant 0 : index
    %c0_33 = arith.constant 0 : index
    %c0_34 = arith.constant 0 : index
    %88 = vector.load %arg8[%c0_32, %c0_33, %c0_34] : memref<3x32x32xf32, #tpu.memory_space<vmem>>, vector<3x32x32xf32>
    %c0_35 = arith.constant 0 : index
    %c0_36 = arith.constant 0 : index
    %89 = vector.load %arg9[%c0_35, %c0_36] : memref<1x32xf32, #tpu.memory_space<vmem>>, vector<1x32xf32>
    %c1_i32_37 = arith.constant 1 : i32
    %90 = tpu.dynamic_rotate %87 by %c1_i32_37 dim 0 : vector<32x32xf32>, i32 -> vector<32x32xf32>
    %cst_38 = arith.constant 0.000000e+00 : f32
    %91 = vector.shape_cast %53 : vector<32x1xi1> to vector<32x1xi1>
    %92 = vector.broadcast %91 : vector<32x1xi1> to vector<32x32xi1>
    %93 = vector.broadcast %cst_38 : f32 to vector<32x32xf32>
    %94 = arith.select %92, %90, %93 : vector<32x32xi1>, vector<32x32xf32>
    %c31_i32 = arith.constant 31 : i32
    %95 = tpu.dynamic_rotate %87 by %c31_i32 dim 0 : vector<32x32xf32>, i32 -> vector<32x32xf32>
    %cst_39 = arith.constant 0.000000e+00 : f32
    %96 = vector.shape_cast %56 : vector<32x1xi1> to vector<32x1xi1>
    %97 = vector.broadcast %96 : vector<32x1xi1> to vector<32x32xi1>
    %98 = vector.broadcast %cst_39 : f32 to vector<32x32xf32>
    %99 = arith.select %97, %95, %98 : vector<32x32xi1>, vector<32x32xf32>
    %100 = vector.extract_strided_slice %88 {offsets = [0, 0, 0], sizes = [1, 32, 32], strides = [1, 1, 1]} : vector<3x32x32xf32> to vector<1x32x32xf32>
    %101 = vector.shape_cast %100 : vector<1x32x32xf32> to vector<32x32xf32>
    %cst_40 = arith.constant dense<0.000000e+00> : vector<32x32xf32>
    %102 = tpu.matmul %94, %101, %cst_40 {dimension_numbers = #tpu.dot_dimension_numbers<[1], [0], [0], [1], [0, 0, 1, 1], [], []>} : vector<32x32xf32>, vector<32x32xf32>, vector<32x32xf32> -> vector<32x32xf32>
    %103 = vector.extract_strided_slice %88 {offsets = [1, 0, 0], sizes = [1, 32, 32], strides = [1, 1, 1]} : vector<3x32x32xf32> to vector<1x32x32xf32>
    %104 = vector.shape_cast %103 : vector<1x32x32xf32> to vector<32x32xf32>
    %cst_41 = arith.constant dense<0.000000e+00> : vector<32x32xf32>
    %105 = tpu.matmul %87, %104, %cst_41 {dimension_numbers = #tpu.dot_dimension_numbers<[1], [0], [0], [1], [0, 0, 1, 1], [], []>} : vector<32x32xf32>, vector<32x32xf32>, vector<32x32xf32> -> vector<32x32xf32>
    %106 = arith.addf %102, %105 : vector<32x32xf32>
    %107 = vector.extract_strided_slice %88 {offsets = [2, 0, 0], sizes = [1, 32, 32], strides = [1, 1, 1]} : vector<3x32x32xf32> to vector<1x32x32xf32>
    %108 = vector.shape_cast %107 : vector<1x32x32xf32> to vector<32x32xf32>
    %cst_42 = arith.constant dense<0.000000e+00> : vector<32x32xf32>
    %109 = tpu.matmul %99, %108, %cst_42 {dimension_numbers = #tpu.dot_dimension_numbers<[1], [0], [0], [1], [0, 0, 1, 1], [], []>} : vector<32x32xf32>, vector<32x32xf32>, vector<32x32xf32> -> vector<32x32xf32>
    %110 = arith.addf %106, %109 : vector<32x32xf32>
    %111 = vector.broadcast %89 : vector<1x32xf32> to vector<32x32xf32>
    %112 = arith.addf %110, %111 : vector<32x32xf32>
    %cst_43 = arith.constant 0.577350259 : f32
    %113 = vector.broadcast %cst_43 : f32 to vector<32x32xf32>
    %114 = arith.mulf %112, %113 : vector<32x32xf32>
    %115 = arith.negf %114 : vector<32x32xf32>
    %116 = math.exp %115 : vector<32x32xf32>
    %cst_44 = arith.constant 1.000000e+00 : f32
    %117 = vector.broadcast %cst_44 : f32 to vector<32x32xf32>
    %118 = arith.addf %117, %116 : vector<32x32xf32>
    %119 = arith.divf %117, %118 : vector<32x32xf32>
    %120 = arith.mulf %114, %119 : vector<32x32xf32>
    %c0_45 = arith.constant 0 : index
    %c0_46 = arith.constant 0 : index
    %121 = vector.load %arg10[%c0_45, %c0_46] : memref<32x32xf32, #tpu.memory_space<vmem>>, vector<32x32xf32>
    %cst_47 = arith.constant dense<0.000000e+00> : vector<32x32xf32>
    %122 = tpu.matmul %120, %121, %cst_47 {dimension_numbers = #tpu.dot_dimension_numbers<[1], [0], [0], [1], [0, 0, 1, 1], [], []>} : vector<32x32xf32>, vector<32x32xf32>, vector<32x32xf32> -> vector<32x32xf32>
    %c0_48 = arith.constant 0 : index
    %c0_49 = arith.constant 0 : index
    %123 = vector.load %arg11[%c0_48, %c0_49] : memref<1x32xf32, #tpu.memory_space<vmem>>, vector<1x32xf32>
    %124 = vector.broadcast %123 : vector<1x32xf32> to vector<32x32xf32>
    %125 = arith.addf %122, %124 : vector<32x32xf32>
    %126 = arith.addf %34, %125 : vector<32x32xf32>
    %127 = vector.broadcast %63 : vector<32x1xf32> to vector<32x32xf32>
    %128 = arith.mulf %126, %127 : vector<32x32xf32>
    %129 = vector.broadcast %63 : vector<32x1xf32> to vector<32x32xf32>
    %130 = arith.mulf %128, %129 : vector<32x32xf32>
    %c0_50 = arith.constant 0 : index
    %c0_51 = arith.constant 0 : index
    %131 = vector.load %arg12[%c0_50, %c0_51] : memref<1x32xf32, #tpu.memory_space<vmem>>, vector<1x32xf32>
    %c0_52 = arith.constant 0 : index
    %c0_53 = arith.constant 0 : index
    %132 = vector.load %arg13[%c0_52, %c0_53] : memref<1x32xf32, #tpu.memory_space<vmem>>, vector<1x32xf32>
    %cst_54 = arith.constant dense<0.000000e+00> : vector<32xf32>
    %133 = vector.multi_reduction <add>, %130, %cst_54 [1] : vector<32x32xf32> to vector<32xf32>
    %134 = vector.shape_cast %133 : vector<32xf32> to vector<32x1xf32>
    %cst_55 = arith.constant 3.200000e+01 : f32
    %135 = vector.broadcast %cst_55 : f32 to vector<32x1xf32>
    %136 = arith.divf %134, %135 : vector<32x1xf32>
    %137 = vector.broadcast %136 : vector<32x1xf32> to vector<32x32xf32>
    %138 = arith.subf %130, %137 : vector<32x32xf32>
    %139 = arith.mulf %138, %138 : vector<32x32xf32>
    %cst_56 = arith.constant dense<0.000000e+00> : vector<32xf32>
    %140 = vector.multi_reduction <add>, %139, %cst_56 [1] : vector<32x32xf32> to vector<32xf32>
    %141 = vector.shape_cast %140 : vector<32xf32> to vector<32x1xf32>
    %cst_57 = arith.constant 3.200000e+01 : f32
    %142 = vector.broadcast %cst_57 : f32 to vector<32x1xf32>
    %143 = arith.divf %141, %142 : vector<32x1xf32>
    %144 = vector.broadcast %136 : vector<32x1xf32> to vector<32x32xf32>
    %145 = arith.subf %130, %144 : vector<32x32xf32>
    %cst_58 = arith.constant 9.99999974E-6 : f32
    %146 = vector.broadcast %cst_58 : f32 to vector<32x1xf32>
    %147 = arith.addf %143, %146 : vector<32x1xf32>
    %148 = math.rsqrt %147 : vector<32x1xf32>
    %149 = vector.broadcast %148 : vector<32x1xf32> to vector<32x32xf32>
    %150 = arith.mulf %145, %149 : vector<32x32xf32>
    %151 = vector.broadcast %131 : vector<1x32xf32> to vector<32x32xf32>
    %152 = arith.mulf %150, %151 : vector<32x32xf32>
    %153 = vector.broadcast %132 : vector<1x32xf32> to vector<32x32xf32>
    %154 = arith.addf %152, %153 : vector<32x32xf32>
    %155 = vector.broadcast %63 : vector<32x1xf32> to vector<32x32xf32>
    %156 = arith.mulf %154, %155 : vector<32x32xf32>
    %c0_59 = arith.constant 0 : index
    %c0_60 = arith.constant 0 : index
    %c0_61 = arith.constant 0 : index
    %157 = vector.load %arg14[%c0_59, %c0_60, %c0_61] : memref<3x32x32xf32, #tpu.memory_space<vmem>>, vector<3x32x32xf32>
    %c0_62 = arith.constant 0 : index
    %c0_63 = arith.constant 0 : index
    %158 = vector.load %arg15[%c0_62, %c0_63] : memref<1x32xf32, #tpu.memory_space<vmem>>, vector<1x32xf32>
    %c1_i32_64 = arith.constant 1 : i32
    %159 = tpu.dynamic_rotate %156 by %c1_i32_64 dim 0 : vector<32x32xf32>, i32 -> vector<32x32xf32>
    %cst_65 = arith.constant 0.000000e+00 : f32
    %160 = vector.shape_cast %53 : vector<32x1xi1> to vector<32x1xi1>
    %161 = vector.broadcast %160 : vector<32x1xi1> to vector<32x32xi1>
    %162 = vector.broadcast %cst_65 : f32 to vector<32x32xf32>
    %163 = arith.select %161, %159, %162 : vector<32x32xi1>, vector<32x32xf32>
    %c31_i32_66 = arith.constant 31 : i32
    %164 = tpu.dynamic_rotate %156 by %c31_i32_66 dim 0 : vector<32x32xf32>, i32 -> vector<32x32xf32>
    %cst_67 = arith.constant 0.000000e+00 : f32
    %165 = vector.shape_cast %56 : vector<32x1xi1> to vector<32x1xi1>
    %166 = vector.broadcast %165 : vector<32x1xi1> to vector<32x32xi1>
    %167 = vector.broadcast %cst_67 : f32 to vector<32x32xf32>
    %168 = arith.select %166, %164, %167 : vector<32x32xi1>, vector<32x32xf32>
    %169 = vector.extract_strided_slice %157 {offsets = [0, 0, 0], sizes = [1, 32, 32], strides = [1, 1, 1]} : vector<3x32x32xf32> to vector<1x32x32xf32>
    %170 = vector.shape_cast %169 : vector<1x32x32xf32> to vector<32x32xf32>
    %cst_68 = arith.constant dense<0.000000e+00> : vector<32x32xf32>
    %171 = tpu.matmul %163, %170, %cst_68 {dimension_numbers = #tpu.dot_dimension_numbers<[1], [0], [0], [1], [0, 0, 1, 1], [], []>} : vector<32x32xf32>, vector<32x32xf32>, vector<32x32xf32> -> vector<32x32xf32>
    %172 = vector.extract_strided_slice %157 {offsets = [1, 0, 0], sizes = [1, 32, 32], strides = [1, 1, 1]} : vector<3x32x32xf32> to vector<1x32x32xf32>
    %173 = vector.shape_cast %172 : vector<1x32x32xf32> to vector<32x32xf32>
    %cst_69 = arith.constant dense<0.000000e+00> : vector<32x32xf32>
    %174 = tpu.matmul %156, %173, %cst_69 {dimension_numbers = #tpu.dot_dimension_numbers<[1], [0], [0], [1], [0, 0, 1, 1], [], []>} : vector<32x32xf32>, vector<32x32xf32>, vector<32x32xf32> -> vector<32x32xf32>
    %175 = arith.addf %171, %174 : vector<32x32xf32>
    %176 = vector.extract_strided_slice %157 {offsets = [2, 0, 0], sizes = [1, 32, 32], strides = [1, 1, 1]} : vector<3x32x32xf32> to vector<1x32x32xf32>
    %177 = vector.shape_cast %176 : vector<1x32x32xf32> to vector<32x32xf32>
    %cst_70 = arith.constant dense<0.000000e+00> : vector<32x32xf32>
    %178 = tpu.matmul %168, %177, %cst_70 {dimension_numbers = #tpu.dot_dimension_numbers<[1], [0], [0], [1], [0, 0, 1, 1], [], []>} : vector<32x32xf32>, vector<32x32xf32>, vector<32x32xf32> -> vector<32x32xf32>
    %179 = arith.addf %175, %178 : vector<32x32xf32>
    %180 = vector.broadcast %158 : vector<1x32xf32> to vector<32x32xf32>
    %181 = arith.addf %179, %180 : vector<32x32xf32>
    %c0_71 = arith.constant 0 : index
    %c0_72 = arith.constant 0 : index
    %182 = vector.load %arg16[%c0_71, %c0_72] : memref<32x128xf32, #tpu.memory_space<vmem>>, vector<32x128xf32>
    %cst_73 = arith.constant dense<0.000000e+00> : vector<32x128xf32>
    %183 = tpu.matmul %181, %182, %cst_73 {dimension_numbers = #tpu.dot_dimension_numbers<[1], [0], [0], [1], [0, 0, 1, 1], [], []>} : vector<32x32xf32>, vector<32x128xf32>, vector<32x128xf32> -> vector<32x128xf32>
    %c0_74 = arith.constant 0 : index
    %c0_75 = arith.constant 0 : index
    %184 = vector.load %arg17[%c0_74, %c0_75] : memref<1x128xf32, #tpu.memory_space<vmem>>, vector<1x128xf32>
    %185 = vector.broadcast %184 : vector<1x128xf32> to vector<32x128xf32>
    %186 = arith.addf %183, %185 : vector<32x128xf32>
    %187 = vector.shape_cast %186 : vector<32x128xf32> to vector<2x16x128xf32>
    %c0_76 = arith.constant 0 : index
    %c0_77 = arith.constant 0 : index
    %c0_78 = arith.constant 0 : index
    %188 = vector.load %arg18[%c0_76, %c0_77, %c0_78] : memref<2x16x128xf32, #tpu.memory_space<vmem>>, vector<2x16x128xf32>
    tpu.vector_store %arg18[%c0_76, %c0_77, %c0_78], %187 {strides = array<i32>} : memref<2x16x128xf32, #tpu.memory_space<vmem>>, vector<2x16x128xf32>,
    return
  }
  func.func @transform_0(%arg0: i32, %arg1: memref<1xi32, #tpu.memory_space<smem>>) -> (i32, i32, i32) {
    %c0_i32 = arith.constant 0 : i32
    %c0_i32_0 = arith.constant 0 : i32
    %c0_i32_1 = arith.constant 0 : i32
    return %arg0, %c0_i32, %c0_i32_0 : i32, i32, i32
  }
  func.func @transform_1(%arg0: i32, %arg1: memref<1xi32, #tpu.memory_space<smem>>) -> (i32, i32, i32) {
    %c0_i32 = arith.constant 0 : i32
    %c0_i32_0 = arith.constant 0 : i32
    %c0_i32_1 = arith.constant 0 : i32
    return %arg0, %c0_i32, %c0_i32_0 : i32, i32, i32
  }
  func.func @transform_2(%arg0: i32, %arg1: memref<1xi32, #tpu.memory_space<smem>>) -> (i32, i32) {
    %c0_i32 = arith.constant 0 : i32
    %c0_i32_0 = arith.constant 0 : i32
    %c0_i32_1 = arith.constant 0 : i32
    return %c0_i32, %c0_i32_0 : i32, i32
  }
  func.func @transform_3(%arg0: i32, %arg1: memref<1xi32, #tpu.memory_space<smem>>) -> (i32, i32) {
    %c0_i32 = arith.constant 0 : i32
    %c0_i32_0 = arith.constant 0 : i32
    %c0_i32_1 = arith.constant 0 : i32
    return %c0_i32, %c0_i32_0 : i32, i32
  }
  func.func @transform_4(%arg0: i32, %arg1: memref<1xi32, #tpu.memory_space<smem>>) -> (i32, i32) {
    %c0_i32 = arith.constant 0 : i32
    %c0_i32_0 = arith.constant 0 : i32
    %c0_i32_1 = arith.constant 0 : i32
    return %c0_i32, %c0_i32_0 : i32, i32
  }
  func.func @transform_5(%arg0: i32, %arg1: memref<1xi32, #tpu.memory_space<smem>>) -> (i32, i32) {
    %c0_i32 = arith.constant 0 : i32
    %c0_i32_0 = arith.constant 0 : i32
    %c0_i32_1 = arith.constant 0 : i32
    return %c0_i32, %c0_i32_0 : i32, i32
  }
  func.func @transform_6(%arg0: i32, %arg1: memref<1xi32, #tpu.memory_space<smem>>) -> (i32, i32, i32) {
    %c0_i32 = arith.constant 0 : i32
    %c0_i32_0 = arith.constant 0 : i32
    %c0_i32_1 = arith.constant 0 : i32
    %c0_i32_2 = arith.constant 0 : i32
    return %c0_i32, %c0_i32_0, %c0_i32_1 : i32, i32, i32
  }
  func.func @transform_7(%arg0: i32, %arg1: memref<1xi32, #tpu.memory_space<smem>>) -> (i32, i32) {
    %c0_i32 = arith.constant 0 : i32
    %c0_i32_0 = arith.constant 0 : i32
    %c0_i32_1 = arith.constant 0 : i32
    return %c0_i32, %c0_i32_0 : i32, i32
  }
  func.func @transform_8(%arg0: i32, %arg1: memref<1xi32, #tpu.memory_space<smem>>) -> (i32, i32) {
    %c0_i32 = arith.constant 0 : i32
    %c0_i32_0 = arith.constant 0 : i32
    %c0_i32_1 = arith.constant 0 : i32
    return %c0_i32, %c0_i32_0 : i32, i32
  }
  func.func @transform_9(%arg0: i32, %arg1: memref<1xi32, #tpu.memory_space<smem>>) -> (i32, i32) {
    %c0_i32 = arith.constant 0 : i32
    %c0_i32_0 = arith.constant 0 : i32
    %c0_i32_1 = arith.constant 0 : i32
    return %c0_i32, %c0_i32_0 : i32, i32
  }
  func.func @transform_10(%arg0: i32, %arg1: memref<1xi32, #tpu.memory_space<smem>>) -> (i32, i32) {
    %c0_i32 = arith.constant 0 : i32
    %c0_i32_0 = arith.constant 0 : i32
    %c0_i32_1 = arith.constant 0 : i32
    return %c0_i32, %c0_i32_0 : i32, i32
  }
  func.func @transform_11(%arg0: i32, %arg1: memref<1xi32, #tpu.memory_space<smem>>) -> (i32, i32) {
    %c0_i32 = arith.constant 0 : i32
    %c0_i32_0 = arith.constant 0 : i32
    %c0_i32_1 = arith.constant 0 : i32
    return %c0_i32, %c0_i32_0 : i32, i32
  }
  func.func @transform_12(%arg0: i32, %arg1: memref<1xi32, #tpu.memory_space<smem>>) -> (i32, i32, i32) {
    %c0_i32 = arith.constant 0 : i32
    %c0_i32_0 = arith.constant 0 : i32
    %c0_i32_1 = arith.constant 0 : i32
    %c0_i32_2 = arith.constant 0 : i32
    return %c0_i32, %c0_i32_0, %c0_i32_1 : i32, i32, i32
  }
  func.func @transform_13(%arg0: i32, %arg1: memref<1xi32, #tpu.memory_space<smem>>) -> (i32, i32) {
    %c0_i32 = arith.constant 0 : i32
    %c0_i32_0 = arith.constant 0 : i32
    %c0_i32_1 = arith.constant 0 : i32
    return %c0_i32, %c0_i32_0 : i32, i32
  }
  func.func @transform_14(%arg0: i32, %arg1: memref<1xi32, #tpu.memory_space<smem>>) -> (i32, i32) {
    %c0_i32 = arith.constant 0 : i32
    %c0_i32_0 = arith.constant 0 : i32
    %c0_i32_1 = arith.constant 0 : i32
    return %c0_i32, %c0_i32_0 : i32, i32
  }
  func.func @transform_15(%arg0: i32, %arg1: memref<1xi32, #tpu.memory_space<smem>>) -> (i32, i32) {
    %c0_i32 = arith.constant 0 : i32
    %c0_i32_0 = arith.constant 0 : i32
    %c0_i32_1 = arith.constant 0 : i32
    return %c0_i32, %c0_i32_0 : i32, i32
  }
  func.func @transform_16(%arg0: i32, %arg1: memref<1xi32, #tpu.memory_space<smem>>) -> (i32, i32, i32) {
    %c0_i32 = arith.constant 0 : i32
    %c0_i32_0 = arith.constant 0 : i32
    %c0_i32_1 = arith.constant 0 : i32
    return %arg0, %c0_i32, %c0_i32_0 : i32, i32, i32
  }
}

</mosaic_0001>

<llo_original>
// kernel: tpu_custom_call.1
$region0: #{tpu_custom_call.1}
  #allocation0 [shape = 'u32[]', space=smem, size = 0x4, offset = 0x4, fixed_abs, tag = 'smem constant byte address 0x4 - core index']
  #allocation1 [shape = 'u32[144,128]{1,0:T(1,128)}', space=vmem, size = 0x12000, scoped, tag = 'internal scratch']
  #allocation2 [shape = 's32[1]{0}', space=sflag, size = 0x4, scoped, tag = 'scoped memory for tpu_custom_call.1']
  #allocation3 [shape = 's32[1]{0:T(128)S(6)}', space=smem, size = 0x200, scoped, tag = 'prefetched SMEM operand 0']
  #allocation4 [shape = 'f32[1,1]{1,0:T(1,128)S(1)}', space=vmem, size = 0x200, scoped, tag = 'scoped memory for tpu_custom_call.1']
  %s0 = inlined_call_operand.<no memory space> [shape: s32[1], index: 0, kind: input, shape index: {}]
  %s1 = inlined_call_operand.vmem [shape: f32[2,16,32], index: 1, kind: input, shape index: {}]
  %s2 = inlined_call_operand.vmem [shape: s32[2,1,16], index: 2, kind: input, shape index: {}]
  %s3 = inlined_call_operand.vmem [shape: f32[32,1], index: 3, kind: input, shape index: {}]
  %s4 = inlined_call_operand.<no memory space> [shape: f32[1,1], index: 4, kind: input, shape index: {}]
  %s5 = inlined_call_operand.vmem [shape: f32[1,32], index: 5, kind: input, shape index: {}]
  %s6 = inlined_call_operand.hbm [shape: f32[1,32], index: 6, kind: input, shape index: {}]
  %s7 = inlined_call_operand.hbm [shape: f32[3,32,32], index: 7, kind: input, shape index: {}]
  %s8 = inlined_call_operand.hbm [shape: f32[1,32], index: 8, kind: input, shape index: {}]
  %s9 = inlined_call_operand.vmem [shape: f32[32,32], index: 9, kind: input, shape index: {}]
  %s10 = inlined_call_operand.vmem [shape: f32[1,32], index: 10, kind: input, shape index: {}]
  %s11 = inlined_call_operand.vmem [shape: f32[1,32], index: 11, kind: input, shape index: {}]
  %s12 = inlined_call_operand.vmem [shape: f32[1,32], index: 12, kind: input, shape index: {}]
  %s13 = inlined_call_operand.hbm [shape: f32[3,32,32], index: 13, kind: input, shape index: {}]
  %s14 = inlined_call_operand.vmem [shape: f32[1,32], index: 14, kind: input, shape index: {}]
  %s15 = inlined_call_operand.hbm [shape: f32[32,128], index: 15, kind: input, shape index: {}]
  %s16 = inlined_call_operand.vmem [shape: f32[1,128], index: 16, kind: input, shape index: {}]
  %s17 = inlined_call_operand.hbm [shape: f32[2,16,128], index: 17, kind: output, shape index: {}]
  %s18 = sld [smem:[#allocation0]]
  $region94: #{tpu_custom_call.1} parent=0
    _
  %s20 = ssub.s32 1, %s18
  %s21 = scalar_select 0, %s20, %s18
  %22 = sst [smem:[#allocation3]] %s0
  %v23 = vstv %s4
  %24 = vst [vmem:[#allocation4] sm:$0x1] %v23
  $region1: #{tpu_custom_call.1} parent=0
    #allocation5 [shape = 'u8[512]{0}', space=vmem, size = 0x400, scoped, tag = 'input window, operand 6, single buffered']
    #allocation6 [shape = 's32[1]{0}', space=sflag, size = 0x4, scoped, tag = 'scoped memory for tpu_custom_call.1']
    #allocation7 [shape = 's32[1]{0}', space=sflag, size = 0x4, scoped, tag = 'scoped memory for tpu_custom_call.1']
    #allocation8 [shape = 'u8[49152]{0}', space=vmem, size = 0xc000, scoped, tag = 'input window, operand 7, single buffered']
    #allocation9 [shape = 's32[1]{0}', space=sflag, size = 0x4, scoped, tag = 'scoped memory for tpu_custom_call.1']
    #allocation10 [shape = 'u8[512]{0}', space=vmem, size = 0x400, scoped, tag = 'input window, operand 8, single buffered']
    #allocation11 [shape = 'u8[49152]{0}', space=vmem, size = 0xc000, scoped, tag = 'input window, operand 13, single buffered']
    #allocation12 [shape = 's32[1]{0}', space=sflag, size = 0x4, scoped, tag = 'scoped memory for tpu_custom_call.1']
    #allocation13 [shape = 'u8[16384]{0}', space=vmem, size = 0x4000, scoped, tag = 'input window, operand 15, single buffered']
    #allocation14 [shape = 'u8[16384]{0}', space=vmem, size = 0x4000, scoped, tag = 'output window, operand 0, single buffered']
    %25 = vsyncpa [#allocation6], 0
    %26 = vsyncpa [#allocation9], 0
    %27 = vsyncpa [#allocation12], 0
    %28 = vsyncpa [#allocation7], 0
    // Predicated region
    $region2: #{tpu_custom_call.1} parent=1 // pred_check
      _
    $region3: #{tpu_custom_call.1} parent=1 // pred_check_branch
      %30 = sbr.rel (0) target = $region5
    $region4: #{tpu_custom_call.1} parent=1 // pred_region
      _
    $region5: #{tpu_custom_call.1} parent=1 // pred_fallthru
      _
    // Predicated region
    $region6: #{tpu_custom_call.1} parent=1 // pred_check
      _
    $region7: #{tpu_custom_call.1} parent=1 // pred_check_branch
      %32 = sbr.rel (0) target = $region9
    $region8: #{tpu_custom_call.1} parent=1 // pred_region
      _
    $region9: #{tpu_custom_call.1} parent=1 // pred_fallthru
      _
    // Predicated region
    $region10: #{tpu_custom_call.1} parent=1 // pred_check
      _
    $region11: #{tpu_custom_call.1} parent=1 // pred_check_branch
      %34 = sbr.rel (0) target = $region13
    $region12: #{tpu_custom_call.1} parent=1 // pred_region
      _
    $region13: #{tpu_custom_call.1} parent=1 // pred_fallthru
      _
    // Predicated region
    $region14: #{tpu_custom_call.1} parent=1 // pred_check
      _
    $region15: #{tpu_custom_call.1} parent=1 // pred_check_branch
      %36 = sbr.rel (0) target = $region17
    $region16: #{tpu_custom_call.1} parent=1 // pred_region
      _
    $region17: #{tpu_custom_call.1} parent=1 // pred_fallthru
      _
    // Predicated region
    $region18: #{tpu_custom_call.1} parent=1 // pred_check
      _
    $region19: #{tpu_custom_call.1} parent=1 // pred_check_branch
      %38 = sbr.rel (0) target = $region21
    $region20: #{tpu_custom_call.1} parent=1 // pred_region
      _
    $region21: #{tpu_custom_call.1} parent=1 // pred_fallthru
      _
    // Predicated region
    $region22: #{tpu_custom_call.1} parent=1 // pred_check
      _
    $region23: #{tpu_custom_call.1} parent=1 // pred_check_branch
      %40 = sbr.rel (0) target = $region25
    $region24: #{tpu_custom_call.1} parent=1 // pred_region
      %s42 = ssub.s32 16, 16
      %43 = vsyncadd [#allocation6], %s42
      %s45 = sshll.u32 [#allocation5], 4
      %s46 = int_to_ptr.vmem [resolvable:$true] %s45
      %48 = dma.hbm_to_vmem [thread:$0]  %s6, 16, %s46, [#allocation6]
    $region25: #{tpu_custom_call.1} parent=1 // pred_fallthru
      _
    // Predicated region
    $region26: #{tpu_custom_call.1} parent=1 // pred_check
      _
    $region27: #{tpu_custom_call.1} parent=1 // pred_check_branch
      %50 = sbr.rel (0) target = $region29
    $region28: #{tpu_custom_call.1} parent=1 // pred_region
      %s52 = ssub.s32 1536, 1536
      %53 = vsyncadd [#allocation9], %s52
      %s54 = sshll.u32 [#allocation8], 4
      %s55 = int_to_ptr.vmem [resolvable:$true] %s54
      %60 = dma.hbm_to_vmem [thread:$0]  %s7, 1536, %s55, [#allocation9], 128, 128, 8
    $region29: #{tpu_custom_call.1} parent=1 // pred_fallthru
      _
    // Predicated region
    $region30: #{tpu_custom_call.1} parent=1 // pred_check
      _
    $region31: #{tpu_custom_call.1} parent=1 // pred_check_branch
      %62 = sbr.rel (0) target = $region33
    $region32: #{tpu_custom_call.1} parent=1 // pred_region
      %s64 = ssub.s32 16, 16
      %65 = vsyncadd [#allocation9], %s64
      %s67 = sshll.u32 [#allocation10], 4
      %s68 = int_to_ptr.vmem [resolvable:$true] %s67
      %70 = dma.hbm_to_vmem [thread:$0]  %s8, 16, %s68, [#allocation9]
    $region33: #{tpu_custom_call.1} parent=1 // pred_fallthru
      _
    // Predicated region
    $region34: #{tpu_custom_call.1} parent=1 // pred_check
      _
    $region35: #{tpu_custom_call.1} parent=1 // pred_check_branch
      %72 = sbr.rel (0) target = $region37
    $region36: #{tpu_custom_call.1} parent=1 // pred_region
      _
    $region37: #{tpu_custom_call.1} parent=1 // pred_fallthru
      _
    // Predicated region
    $region38: #{tpu_custom_call.1} parent=1 // pred_check
      _
    $region39: #{tpu_custom_call.1} parent=1 // pred_check_branch
      %74 = sbr.rel (0) target = $region41
    $region40: #{tpu_custom_call.1} parent=1 // pred_region
      _
    $region41: #{tpu_custom_call.1} parent=1 // pred_fallthru
      _
    // Predicated region
    $region42: #{tpu_custom_call.1} parent=1 // pred_check
      _
    $region43: #{tpu_custom_call.1} parent=1 // pred_check_branch
      %76 = sbr.rel (0) target = $region45
    $region44: #{tpu_custom_call.1} parent=1 // pred_region
      _
    $region45: #{tpu_custom_call.1} parent=1 // pred_fallthru
      _
    // Predicated region
    $region46: #{tpu_custom_call.1} parent=1 // pred_check
      _
    $region47: #{tpu_custom_call.1} parent=1 // pred_check_branch
      %78 = sbr.rel (0) target = $region49
    $region48: #{tpu_custom_call.1} parent=1 // pred_region
      _
    $region49: #{tpu_custom_call.1} parent=1 // pred_fallthru
      _
    // Predicated region
    $region50: #{tpu_custom_call.1} parent=1 // pred_check
      _
    $region51: #{tpu_custom_call.1} parent=1 // pred_check_branch
      %80 = sbr.rel (0) target = $region53
    $region52: #{tpu_custom_call.1} parent=1 // pred_region
      %s82 = ssub.s32 1536, 1536
      %83 = vsyncadd [#allocation12], %s82
      %s84 = sshll.u32 [#allocation11], 4
      %s85 = int_to_ptr.vmem [resolvable:$true] %s84
      %90 = dma.hbm_to_vmem [thread:$0]  %s13, 1536, %s85, [#allocation12], 128, 128, 8
    $region53: #{tpu_custom_call.1} parent=1 // pred_fallthru
      _
    // Predicated region
    $region54: #{tpu_custom_call.1} parent=1 // pred_check
      _
    $region55: #{tpu_custom_call.1} parent=1 // pred_check_branch
      %92 = sbr.rel (0) target = $region57
    $region56: #{tpu_custom_call.1} parent=1 // pred_region
      _
    $region57: #{tpu_custom_call.1} parent=1 // pred_fallthru
      _
    // Predicated region
    $region58: #{tpu_custom_call.1} parent=1 // pred_check
      _
    $region59: #{tpu_custom_call.1} parent=1 // pred_check_branch
      %94 = sbr.rel (0) target = $region61
    $region60: #{tpu_custom_call.1} parent=1 // pred_region
      %s96 = ssub.s32 512, 512
      %97 = vsyncadd [#allocation12], %s96
      %s98 = sshll.u32 [#allocation13], 4
      %s99 = int_to_ptr.vmem [resolvable:$true] %s98
      %104 = dma.hbm_to_vmem [thread:$0]  %s15, 512, %s99, [#allocation12], 128, 128, 8
    $region61: #{tpu_custom_call.1} parent=1 // pred_fallthru
      _
    // Predicated region
    $region62: #{tpu_custom_call.1} parent=1 // pred_check
      _
    $region63: #{tpu_custom_call.1} parent=1 // pred_check_branch
      %106 = sbr.rel (0) target = $region65
    $region64: #{tpu_custom_call.1} parent=1 // pred_region
      _
    $region65: #{tpu_custom_call.1} parent=1 // pred_fallthru
      _
    // Predicated region
    $region66: #{tpu_custom_call.1} parent=1 // pred_check
      _
    $region67: #{tpu_custom_call.1} parent=1 // pred_check_branch
      %108 = sbr.rel (0) target = $region69
    $region68: #{tpu_custom_call.1} parent=1 // pred_region
      %109 = dma.done [#allocation6], 16
    $region69: #{tpu_custom_call.1} parent=1 // pred_fallthru
      _
    // Predicated region
    $region70: #{tpu_custom_call.1} parent=1 // pred_check
      _
    $region71: #{tpu_custom_call.1} parent=1 // pred_check_branch
      %111 = sbr.rel (0) target = $region73
    $region72: #{tpu_custom_call.1} parent=1 // pred_region
      %112 = dma.done [#allocation9], 1536
    $region73: #{tpu_custom_call.1} parent=1 // pred_fallthru
      _
    // Predicated region
    $region74: #{tpu_custom_call.1} parent=1 // pred_check
      _
    $region75: #{tpu_custom_call.1} parent=1 // pred_check_branch
      %114 = sbr.rel (0) target = $region77
    $region76: #{tpu_custom_call.1} parent=1 // pred_region
      %115 = dma.done [#allocation9], 16
    $region77: #{tpu_custom_call.1} parent=1 // pred_fallthru
      _
    // Predicated region
    $region78: #{tpu_custom_call.1} parent=1 // pred_check
      _
    $region79: #{tpu_custom_call.1} parent=1 // pred_check_branch
      %117 = sbr.rel (0) target = $region81
    $region80: #{tpu_custom_call.1} parent=1 // pred_region
      %118 = dma.done [#allocation12], 1536
    $region81: #{tpu_custom_call.1} parent=1 // pred_fallthru
      _
    // Predicated region
    $region82: #{tpu_custom_call.1} parent=1 // pred_check
      _
    $region83: #{tpu_custom_call.1} parent=1 // pred_check_branch
      %120 = sbr.rel (0) target = $region85
    $region84: #{tpu_custom_call.1} parent=1 // pred_region
      %121 = dma.done [#allocation12], 512
    $region85: #{tpu_custom_call.1} parent=1 // pred_fallthru
      _
    %s122 = sld [smem:[#allocation3]]
    %v123 = vld [vmem:[%s1] sm:$0xff]
    %v124 = vld [vmem:[%s1 + $0x8] sm:$0xff]
    %v125 = vld [vmem:[%s1 + $0x10] sm:$0xff]
    %v126 = vld [vmem:[%s1 + $0x18] sm:$0xff]
    %v127 = vld [vmem:[%s2] sm:$0x1]
    %v128 = vld [vmem:[%s2 + $0x1] sm:$0x1]
    %v129 = vld [vmem:[%s3] sm:$0xff]
    %v130 = vld [vmem:[%s3 + $0x8] sm:$0xff]
    %v131 = vld [vmem:[%s3 + $0x10] sm:$0xff]
    %v132 = vld [vmem:[%s3 + $0x18] sm:$0xff]
    %v133 = vld [vmem:[#allocation4] sm:$0x1]
    %v135 = vlaneseq
    %v136 = vshrl.u32 %v135, 7
    %v137 = vsub.s32 0, %v136
    %v138 = vrot.slane %v133, %v137
    %vm140 = vcmask 261120
    %v142 = vsel %vm140, %v123, 0
    %v145 = vsel %vm140, %v124, 0
    %v148 = vsel %vm140, %v125, 0
    %v151 = vsel %vm140, %v126, 0
    %153 = vmatprep.subr.mxu0 0.0
    %154 = vmatpush1.msra.mxu0 %v129
    %155 = vmatprep.subr.mxu0 0.0
    %156 = vmatpush1.msra.mxu0 %v130
    %157 = vmatprep.subr.mxu0 0.0
    %158 = vmatpush1.msra.mxu0 %v131
    %159 = vmatprep.subr.mxu0 0.0
    %160 = vmatpush1.msra.mxu0 %v132
    %161 = vmatprep.subr.mxu0 0.0
    %162 = vmatpush1.msra.mxu0 0.0
    %163 = vmatprep.subr.mxu0 0.0
    %164 = vmatpush1.msra.mxu0 0.0
    %165 = vmatprep.subr.mxu0 0.0
    %166 = vmatpush1.msra.mxu0 0.0
    %167 = vmatprep.subr.mxu0 0.0
    %168 = vmatpush1.msra.mxu0 0.0
    %169 = vmatprep.subr.mxu0 0.0
    %170 = vmatpush1.msra.mxu0 0.0
    %171 = vmatprep.subr.mxu0 0.0
    %172 = vmatpush1.msra.mxu0 0.0
    %173 = vmatprep.subr.mxu0 0.0
    %174 = vmatpush1.msra.mxu0 0.0
    %175 = vmatprep.subr.mxu0 0.0
    %176 = vmatpush1.msra.mxu0 0.0
    %177 = vmatprep.subr.mxu0 0.0
    %178 = vmatpush1.msra.mxu0 0.0
    %179 = vmatprep.subr.mxu0 0.0
    %180 = vmatpush1.msra.mxu0 0.0
    %181 = vmatprep.subr.mxu0 0.0
    %182 = vmatpush1.msra.mxu0 0.0
    %183 = vmatprep.subr.mxu0 0.0
    %184 = vmatpush1.msra.mxu0 0.0
    %185 = vmatprep.subr.mxu0 0.0
    %186 = vmatpush1.msra.mxu0 0.0
    %187 = vmatprep.subr.mxu0 0.0
    %188 = vmatpush1.msra.mxu0 0.0
    %189 = vmatprep.subr.mxu0 0.0
    %190 = vmatpush1.msra.mxu0 0.0
    %191 = vmatprep.subr.mxu0 0.0
    %192 = vmatpush1.msra.mxu0 0.0
    %193 = vmatprep.subr.mxu0 0.0
    %194 = vmatpush1.msra.mxu0 0.0
    %195 = vmatprep.subr.mxu0 0.0
    %196 = vmatpush1.msra.mxu0 0.0
    %197 = vmatprep.subr.mxu0 0.0
    %198 = vmatpush1.msra.mxu0 0.0
    %199 = vmatprep.subr.mxu0 0.0
    %200 = vmatpush1.msra.mxu0 0.0
    %201 = vmatprep.subr.mxu0 0.0
    %202 = vmatpush1.msra.mxu0 0.0
    %203 = vmatprep.subr.mxu0 0.0
    %204 = vmatpush1.msra.mxu0 0.0
    %205 = vmatprep.subr.mxu0 0.0
    %206 = vmatpush1.msra.mxu0 0.0
    %207 = vmatprep.subr.mxu0 0.0
    %208 = vmatpush1.msra.mxu0 0.0
    %209 = vmatprep.subr.mxu0 0.0
    %210 = vmatpush1.msra.mxu0 0.0
    %211 = vmatprep.subr.mxu0 0.0
    %212 = vmatpush1.msra.mxu0 0.0
    %213 = vmatprep.subr.mxu0 0.0
    %214 = vmatpush1.msra.mxu0 0.0
    %215 = vmatprep.subr.mxu0 0.0
    %216 = vmatpush1.msra.mxu0 0.0
    %217 = vmatprep.mubr.f32.mxu0 0.0
    %218 = vmatmul.mubr.f32.gmra.mrb[0].mxu0 %v142
    %v219 = vpop.f32.mrb[0].mxu0
    %v220 = vadd.f32 %v138, %v219
    %v221 = vpop.f32.mrb[0].mxu0
    %222 = vmatprep.mubr.f32.mxu0 0.0
    %223 = vmatmul.mubr.f32.gmra.mrb[0].mxu0 %v145
    %v224 = vpop.f32.mrb[0].mxu0
    %v225 = vadd.f32 %v138, %v224
    %v226 = vpop.f32.mrb[0].mxu0
    %227 = vmatprep.mubr.f32.mxu0 0.0
    %228 = vmatmul.mubr.f32.gmra.mrb[0].mxu0 %v148
    %v229 = vpop.f32.mrb[0].mxu0
    %v230 = vadd.f32 %v138, %v229
    %v231 = vpop.f32.mrb[0].mxu0
    %232 = vmatprep.mubr.f32.mxu0 0.0
    %233 = vmatmul.mubr.f32.gmra.mrb[0].mxu0 %v151
    %v234 = vpop.f32.mrb[0].mxu0
    %v235 = vadd.f32 %v138, %v234
    %v236 = vpop.f32.mrb[0].mxu0
    %237 = vdwg.mxu0
    %v238 = vxor.u32 %v220, 2147483648
    %v239 = vxor.u32 %v225, 2147483648
    %v240 = vxor.u32 %v230, 2147483648
    %v241 = vxor.u32 %v235, 2147483648
    %v242 = vmul.f32 %v238, 1.442695
    %v243 = vpow.pop %v242
    %v244 = vmul.f32 %v239, 1.442695
    %v245 = vpow.pop %v244
    %v246 = vmul.f32 %v240, 1.442695
    %v247 = vpow.pop %v246
    %v248 = vmul.f32 %v241, 1.442695
    %v249 = vpow.pop %v248
    %v250 = vadd.f32 %v243, 1.0
    %v251 = vadd.f32 %v245, 1.0
    %v252 = vadd.f32 %v247, 1.0
    %v253 = vadd.f32 %v249, 1.0
    %v254 = vrcp.pop %v250
    %v255 = vmul.f32 1.0, %v254
    %v256 = vrcp.pop %v251
    %v257 = vmul.f32 1.0, %v256
    %v258 = vrcp.pop %v252
    %v259 = vmul.f32 1.0, %v258
    %v260 = vrcp.pop %v253
    %v261 = vmul.f32 1.0, %v260
    %v262 = vadd.f32 %v255, 0.0
    %v263 = vadd.f32 %v257, 0.0
    %v264 = vadd.f32 %v259, 0.0
    %v265 = vadd.f32 %v261, 0.0
    %267 = vset.pattern.permute.xlu0 0
    %268 = vperm.xlu0 %267, %v262
    %v269 = vpop.permute.xlu0 %268
    %272 = vset.pattern.permute.xlu0 0
    %273 = vperm.xlu0 %272, %v263
    %v274 = vpop.permute.xlu0 %273
    %277 = vset.pattern.permute.xlu0 0
    %278 = vperm.xlu0 %277, %v264
    %v279 = vpop.permute.xlu0 %278
    %282 = vset.pattern.permute.xlu0 0
    %283 = vperm.xlu0 %282, %v265
    %v284 = vpop.permute.xlu0 %283
    %v286 = vmul.f32 %v123, %v269
    %v287 = vmul.f32 %v124, %v274
    %v288 = vmul.f32 %v125, %v279
    %v289 = vmul.f32 %v126, %v284
    %v290 = vlaneseq
    %v291 = vshrl.u32 %v290, 7
    %v292 = vadd.s32 %v291, 8
    %v293 = vlaneseq
    %v294 = vshrl.u32 %v293, 7
    %v295 = vsub.s32 0, %v294
    %v296 = vrot.slane %v127, %v295
    %v297 = vlaneseq
    %v298 = vshrl.u32 %v297, 7
    %v299 = vsub.s32 0, %v298
    %v300 = vrot.slane %v128, %v299
    %vm301 = vcmp.eq.s32.totalorder %v291, %v296
    %vm302 = vcmp.eq.s32.totalorder %v292, %v296
    %vm303 = vcmp.eq.s32.totalorder %v291, %v300
    %vm304 = vcmp.eq.s32.totalorder %v292, %v300
    %v305 = vsel %vm301, 1, 0
    %v306 = vsel %vm302, 1, 0
    %v307 = vsel %vm303, 1, 0
    %v308 = vsel %vm304, 1, 0
    %v309 = vcvt.s32.f32 %v305
    %v310 = vcvt.s32.f32 %v306
    %v311 = vcvt.s32.f32 %v307
    %v312 = vcvt.s32.f32 %v308
    %vm313 = vcmask 130048
    %v315 = vsel %vm313, %v309, 0
    %v318 = vsel %vm313, %v310, 0
    %320 = vmatprep.subr.mxu0 0.0
    %321 = vmatpush1.msra.mxu0 %v286
    %322 = vmatprep.subr.mxu0 0.0
    %323 = vmatpush1.msra.mxu0 %v287
    %324 = vmatprep.subr.mxu0 0.0
    %325 = vmatpush1.msra.mxu0 0.0
    %326 = vmatprep.subr.mxu0 0.0
    %327 = vmatpush1.msra.mxu0 0.0
    %328 = vmatprep.subr.mxu0 0.0
    %329 = vmatpush1.msra.mxu0 0.0
    %330 = vmatprep.subr.mxu0 0.0
    %331 = vmatpush1.msra.mxu0 0.0
    %332 = vmatprep.subr.mxu0 0.0
    %333 = vmatpush1.msra.mxu0 0.0
    %334 = vmatprep.subr.mxu0 0.0
    %335 = vmatpush1.msra.mxu0 0.0
    %336 = vmatprep.subr.mxu0 0.0
    %337 = vmatpush1.msra.mxu0 0.0
    %338 = vmatprep.subr.mxu0 0.0
    %339 = vmatpush1.msra.mxu0 0.0
    %340 = vmatprep.subr.mxu0 0.0
    %341 = vmatpush1.msra.mxu0 0.0
    %342 = vmatprep.subr.mxu0 0.0
    %343 = vmatpush1.msra.mxu0 0.0
    %344 = vmatprep.subr.mxu0 0.0
    %345 = vmatpush1.msra.mxu0 0.0
    %346 = vmatprep.subr.mxu0 0.0
    %347 = vmatpush1.msra.mxu0 0.0
    %348 = vmatprep.subr.mxu0 0.0
    %349 = vmatpush1.msra.mxu0 0.0
    %350 = vmatprep.subr.mxu0 0.0
    %351 = vmatpush1.msra.mxu0 0.0
    %352 = vmatprep.subr.mxu0 0.0
    %353 = vmatpush1.msra.mxu0 0.0
    %354 = vmatprep.subr.mxu0 0.0
    %355 = vmatpush1.msra.mxu0 0.0
    %356 = vmatprep.subr.mxu0 0.0
    %357 = vmatpush1.msra.mxu0 0.0
    %358 = vmatprep.subr.mxu0 0.0
    %359 = vmatpush1.msra.mxu0 0.0
    %360 = vmatprep.subr.mxu0 0.0
    %361 = vmatpush1.msra.mxu0 0.0
    %362 = vmatprep.subr.mxu0 0.0
    %363 = vmatpush1.msra.mxu0 0.0
    %364 = vmatprep.subr.mxu0 0.0
    %365 = vmatpush1.msra.mxu0 0.0
    %366 = vmatprep.subr.mxu0 0.0
    %367 = vmatpush1.msra.mxu0 0.0
    %368 = vmatprep.subr.mxu0 0.0
    %369 = vmatpush1.msra.mxu0 0.0
    %370 = vmatprep.subr.mxu0 0.0
    %371 = vmatpush1.msra.mxu0 0.0
    %372 = vmatprep.subr.mxu0 0.0
    %373 = vmatpush1.msra.mxu0 0.0
    %374 = vmatprep.subr.mxu0 0.0
    %375 = vmatpush1.msra.mxu0 0.0
    %376 = vmatprep.subr.mxu0 0.0
    %377 = vmatpush1.msra.mxu0 0.0
    %378 = vmatprep.subr.mxu0 0.0
    %379 = vmatpush1.msra.mxu0 0.0
    %380 = vmatprep.subr.mxu0 0.0
    %381 = vmatpush1.msra.mxu0 0.0
    %382 = vmatprep.subr.mxu0 0.0
    %383 = vmatpush1.msra.mxu0 0.0
    %384 = vmatprep.mubr.f32.mxu0 0.0
    %385 = vmatmul.mubr.f32.gmra.mrb[0].mxu0 %v315
    %v386 = vpop.f32.mrb[0].mxu0
    %v387 = vadd.f32 0.0, %v386
    %v388 = vpop.f32.mrb[0].mxu0
    %389 = vmatprep.mubr.f32.mxu0 0.0
    %390 = vmatmul.mubr.f32.gmra.mrb[0].mxu0 %v318
    %v391 = vpop.f32.mrb[0].mxu0
    %v392 = vadd.f32 0.0, %v391
    %v393 = vpop.f32.mrb[0].mxu0
    %394 = vdwg.mxu0
    %v396 = vsel %vm313, %v311, 0
    %v399 = vsel %vm313, %v312, 0
    %401 = vmatprep.subr.mxu0 0.0
    %402 = vmatpush1.msra.mxu0 %v288
    %403 = vmatprep.subr.mxu0 0.0
    %404 = vmatpush1.msra.mxu0 %v289
    %405 = vmatprep.subr.mxu0 0.0
    %406 = vmatpush1.msra.mxu0 0.0
    %407 = vmatprep.subr.mxu0 0.0
    %408 = vmatpush1.msra.mxu0 0.0
    %409 = vmatprep.subr.mxu0 0.0
    %410 = vmatpush1.msra.mxu0 0.0
    %411 = vmatprep.subr.mxu0 0.0
    %412 = vmatpush1.msra.mxu0 0.0
    %413 = vmatprep.subr.mxu0 0.0
    %414 = vmatpush1.msra.mxu0 0.0
    %415 = vmatprep.subr.mxu0 0.0
    %416 = vmatpush1.msra.mxu0 0.0
    %417 = vmatprep.subr.mxu0 0.0
    %418 = vmatpush1.msra.mxu0 0.0
    %419 = vmatprep.subr.mxu0 0.0
    %420 = vmatpush1.msra.mxu0 0.0
    %421 = vmatprep.subr.mxu0 0.0
    %422 = vmatpush1.msra.mxu0 0.0
    %423 = vmatprep.subr.mxu0 0.0
    %424 = vmatpush1.msra.mxu0 0.0
    %425 = vmatprep.subr.mxu0 0.0
    %426 = vmatpush1.msra.mxu0 0.0
    %427 = vmatprep.subr.mxu0 0.0
    %428 = vmatpush1.msra.mxu0 0.0
    %429 = vmatprep.subr.mxu0 0.0
    %430 = vmatpush1.msra.mxu0 0.0
    %431 = vmatprep.subr.mxu0 0.0
    %432 = vmatpush1.msra.mxu0 0.0
    %433 = vmatprep.subr.mxu0 0.0
    %434 = vmatpush1.msra.mxu0 0.0
    %435 = vmatprep.subr.mxu0 0.0
    %436 = vmatpush1.msra.mxu0 0.0
    %437 = vmatprep.subr.mxu0 0.0
    %438 = vmatpush1.msra.mxu0 0.0
    %439 = vmatprep.subr.mxu0 0.0
    %440 = vmatpush1.msra.mxu0 0.0
    %441 = vmatprep.subr.mxu0 0.0
    %442 = vmatpush1.msra.mxu0 0.0
    %443 = vmatprep.subr.mxu0 0.0
    %444 = vmatpush1.msra.mxu0 0.0
    %445 = vmatprep.subr.mxu0 0.0
    %446 = vmatpush1.msra.mxu0 0.0
    %447 = vmatprep.subr.mxu0 0.0
    %448 = vmatpush1.msra.mxu0 0.0
    %449 = vmatprep.subr.mxu0 0.0
    %450 = vmatpush1.msra.mxu0 0.0
    %451 = vmatprep.subr.mxu0 0.0
    %452 = vmatpush1.msra.mxu0 0.0
    %453 = vmatprep.subr.mxu0 0.0
    %454 = vmatpush1.msra.mxu0 0.0
    %455 = vmatprep.subr.mxu0 0.0
    %456 = vmatpush1.msra.mxu0 0.0
    %457 = vmatprep.subr.mxu0 0.0
    %458 = vmatpush1.msra.mxu0 0.0
    %459 = vmatprep.subr.mxu0 0.0
    %460 = vmatpush1.msra.mxu0 0.0
    %461 = vmatprep.subr.mxu0 0.0
    %462 = vmatpush1.msra.mxu0 0.0
    %463 = vmatprep.subr.mxu0 0.0
    %464 = vmatpush1.msra.mxu0 0.0
    %465 = vmatprep.mubr.f32.mxu0 0.0
    %466 = vmatmul.mubr.f32.gmra.mrb[0].mxu0 %v396
    %v467 = vpop.f32.mrb[0].mxu0
    %v468 = vadd.f32 0.0, %v467
    %v469 = vpop.f32.mrb[0].mxu0
    %470 = vmatprep.mubr.f32.mxu0 0.0
    %471 = vmatmul.mubr.f32.gmra.mrb[0].mxu0 %v399
    %v472 = vpop.f32.mrb[0].mxu0
    %v473 = vadd.f32 0.0, %v472
    %v474 = vpop.f32.mrb[0].mxu0
    %475 = vdwg.mxu0
    %476 = vmatprep.subr.mxu0 0.0
    %477 = vmatpush1.msra.mxu0 %v262
    %478 = vmatprep.subr.mxu0 0.0
    %479 = vmatpush1.msra.mxu0 %v263
    %480 = vmatprep.subr.mxu0 0.0
    %481 = vmatpush1.msra.mxu0 0.0
    %482 = vmatprep.subr.mxu0 0.0
    %483 = vmatpush1.msra.mxu0 0.0
    %484 = vmatprep.subr.mxu0 0.0
    %485 = vmatpush1.msra.mxu0 0.0
    %486 = vmatprep.subr.mxu0 0.0
    %487 = vmatpush1.msra.mxu0 0.0
    %488 = vmatprep.subr.mxu0 0.0
    %489 = vmatpush1.msra.mxu0 0.0
    %490 = vmatprep.subr.mxu0 0.0
    %491 = vmatpush1.msra.mxu0 0.0
    %492 = vmatprep.subr.mxu0 0.0
    %493 = vmatpush1.msra.mxu0 0.0
    %494 = vmatprep.subr.mxu0 0.0
    %495 = vmatpush1.msra.mxu0 0.0
    %496 = vmatprep.subr.mxu0 0.0
    %497 = vmatpush1.msra.mxu0 0.0
    %498 = vmatprep.subr.mxu0 0.0
    %499 = vmatpush1.msra.mxu0 0.0
    %500 = vmatprep.subr.mxu0 0.0
    %501 = vmatpush1.msra.mxu0 0.0
    %502 = vmatprep.subr.mxu0 0.0
    %503 = vmatpush1.msra.mxu0 0.0
    %504 = vmatprep.subr.mxu0 0.0
    %505 = vmatpush1.msra.mxu0 0.0
    %506 = vmatprep.subr.mxu0 0.0
    %507 = vmatpush1.msra.mxu0 0.0
    %508 = vmatprep.subr.mxu0 0.0
    %509 = vmatpush1.msra.mxu0 0.0
    %510 = vmatprep.subr.mxu0 0.0
    %511 = vmatpush1.msra.mxu0 0.0
    %512 = vmatprep.subr.mxu0 0.0
    %513 = vmatpush1.msra.mxu0 0.0
    %514 = vmatprep.subr.mxu0 0.0
    %515 = vmatpush1.msra.mxu0 0.0
    %516 = vmatprep.subr.mxu0 0.0
    %517 = vmatpush1.msra.mxu0 0.0
    %518 = vmatprep.subr.mxu0 0.0
    %519 = vmatpush1.msra.mxu0 0.0
    %520 = vmatprep.subr.mxu0 0.0
    %521 = vmatpush1.msra.mxu0 0.0
    %522 = vmatprep.subr.mxu0 0.0
    %523 = vmatpush1.msra.mxu0 0.0
    %524 = vmatprep.subr.mxu0 0.0
    %525 = vmatpush1.msra.mxu0 0.0
    %526 = vmatprep.subr.mxu0 0.0
    %527 = vmatpush1.msra.mxu0 0.0
    %528 = vmatprep.subr.mxu0 0.0
    %529 = vmatpush1.msra.mxu0 0.0
    %530 = vmatprep.subr.mxu0 0.0
    %531 = vmatpush1.msra.mxu0 0.0
    %532 = vmatprep.subr.mxu0 0.0
    %533 = vmatpush1.msra.mxu0 0.0
    %534 = vmatprep.subr.mxu0 0.0
    %535 = vmatpush1.msra.mxu0 0.0
    %536 = vmatprep.subr.mxu0 0.0
    %537 = vmatpush1.msra.mxu0 0.0
    %538 = vmatprep.subr.mxu0 0.0
    %539 = vmatpush1.msra.mxu0 0.0
    %540 = vmatprep.mubr.f32.mxu0 0.0
    %541 = vmatmul.mubr.f32.gmra.mrb[0].mxu0 %v315
    %v542 = vpop.f32.mrb[0].mxu0
    %v543 = vadd.f32 1e-05, %v542
    %v544 = vpop.f32.mrb[0].mxu0
    %545 = vmatprep.mubr.f32.mxu0 0.0
    %546 = vmatmul.mubr.f32.gmra.mrb[0].mxu0 %v318
    %v547 = vpop.f32.mrb[0].mxu0
    %v548 = vadd.f32 1e-05, %v547
    %v549 = vpop.f32.mrb[0].mxu0
    %550 = vdwg.mxu0
    %551 = vmatprep.subr.mxu0 0.0
    %552 = vmatpush1.msra.mxu0 %v264
    %553 = vmatprep.subr.mxu0 0.0
    %554 = vmatpush1.msra.mxu0 %v265
    %555 = vmatprep.subr.mxu0 0.0
    %556 = vmatpush1.msra.mxu0 0.0
    %557 = vmatprep.subr.mxu0 0.0
    %558 = vmatpush1.msra.mxu0 0.0
    %559 = vmatprep.subr.mxu0 0.0
    %560 = vmatpush1.msra.mxu0 0.0
    %561 = vmatprep.subr.mxu0 0.0
    %562 = vmatpush1.msra.mxu0 0.0
    %563 = vmatprep.subr.mxu0 0.0
    %564 = vmatpush1.msra.mxu0 0.0
    %565 = vmatprep.subr.mxu0 0.0
    %566 = vmatpush1.msra.mxu0 0.0
    %567 = vmatprep.subr.mxu0 0.0
    %568 = vmatpush1.msra.mxu0 0.0
    %569 = vmatprep.subr.mxu0 0.0
    %570 = vmatpush1.msra.mxu0 0.0
    %571 = vmatprep.subr.mxu0 0.0
    %572 = vmatpush1.msra.mxu0 0.0
    %573 = vmatprep.subr.mxu0 0.0
    %574 = vmatpush1.msra.mxu0 0.0
    %575 = vmatprep.subr.mxu0 0.0
    %576 = vmatpush1.msra.mxu0 0.0
    %577 = vmatprep.subr.mxu0 0.0
    %578 = vmatpush1.msra.mxu0 0.0
    %579 = vmatprep.subr.mxu0 0.0
    %580 = vmatpush1.msra.mxu0 0.0
    %581 = vmatprep.subr.mxu0 0.0
    %582 = vmatpush1.msra.mxu0 0.0
    %583 = vmatprep.subr.mxu0 0.0
    %584 = vmatpush1.msra.mxu0 0.0
    %585 = vmatprep.subr.mxu0 0.0
    %586 = vmatpush1.msra.mxu0 0.0
    %587 = vmatprep.subr.mxu0 0.0
    %588 = vmatpush1.msra.mxu0 0.0
    %589 = vmatprep.subr.mxu0 0.0
    %590 = vmatpush1.msra.mxu0 0.0
    %591 = vmatprep.subr.mxu0 0.0
    %592 = vmatpush1.msra.mxu0 0.0
    %593 = vmatprep.subr.mxu0 0.0
    %594 = vmatpush1.msra.mxu0 0.0
    %595 = vmatprep.subr.mxu0 0.0
    %596 = vmatpush1.msra.mxu0 0.0
    %597 = vmatprep.subr.mxu0 0.0
    %598 = vmatpush1.msra.mxu0 0.0
    %599 = vmatprep.subr.mxu0 0.0
    %600 = vmatpush1.msra.mxu0 0.0
    %601 = vmatprep.subr.mxu0 0.0
    %602 = vmatpush1.msra.mxu0 0.0
    %603 = vmatprep.subr.mxu0 0.0
    %604 = vmatpush1.msra.mxu0 0.0
    %605 = vmatprep.subr.mxu0 0.0
    %606 = vmatpush1.msra.mxu0 0.0
    %607 = vmatprep.subr.mxu0 0.0
    %608 = vmatpush1.msra.mxu0 0.0
    %609 = vmatprep.subr.mxu0 0.0
    %610 = vmatpush1.msra.mxu0 0.0
    %611 = vmatprep.subr.mxu0 0.0
    %612 = vmatpush1.msra.mxu0 0.0
    %613 = vmatprep.subr.mxu0 0.0
    %614 = vmatpush1.msra.mxu0 0.0
    %615 = vmatprep.mubr.f32.mxu0 0.0
    %616 = vmatmul.mubr.f32.gmra.mrb[0].mxu0 %v396
    %v617 = vpop.f32.mrb[0].mxu0
    %v618 = vadd.f32 1e-05, %v617
    %v619 = vpop.f32.mrb[0].mxu0
    %620 = vmatprep.mubr.f32.mxu0 0.0
    %621 = vmatmul.mubr.f32.gmra.mrb[0].mxu0 %v399
    %v622 = vpop.f32.mrb[0].mxu0
    %v623 = vadd.f32 1e-05, %v622
    %v624 = vpop.f32.mrb[0].mxu0
    %625 = vdwg.mxu0
    %v626 = vrcp.pop %v543
    %v627 = vrcp.pop %v548
    %v628 = vrcp.pop %v618
    %v629 = vrcp.pop %v623
    %631 = vset.pattern.permute.xlu0 0
    %632 = vperm.xlu0 %631, %v626
    %v633 = vpop.permute.xlu0 %632
    %636 = vset.pattern.permute.xlu0 0
    %637 = vperm.xlu0 %636, %v627
    %v638 = vpop.permute.xlu0 %637
    %641 = vset.pattern.permute.xlu0 0
    %642 = vperm.xlu0 %641, %v628
    %v643 = vpop.permute.xlu0 %642
    %646 = vset.pattern.permute.xlu0 0
    %647 = vperm.xlu0 %646, %v629
    %v648 = vpop.permute.xlu0 %647
    %v650 = vmul.f32 %v387, %v633
    %v651 = vmul.f32 %v392, %v638
    %v652 = vmul.f32 %v468, %v643
    %v653 = vmul.f32 %v473, %v648
    %v654 = vadd.s32 %v291, 16
    %v655 = vadd.s32 %v291, 24
    %vm656 = vcmp.lt.s32.totalorder %v291, 0
    %v657 = vsub.s32 0, %v291
    %v658 = vsel %vm656, %v657, %v291
    %v659 = vshrl.u32 %v658, 4
    %v660 = vand.u32 %v658, 15
    %v661 = vsub.s32 0, %v660
    %v662 = vsel %vm656, %v661, %v660
    %vm663 = vcmp.lt.s32.totalorder %v292, 0
    %v664 = vsub.s32 0, %v292
    %v665 = vsel %vm663, %v664, %v292
    %v666 = vshrl.u32 %v665, 4
    %v667 = vand.u32 %v665, 15
    %v668 = vsub.s32 0, %v667
    %v669 = vsel %vm663, %v668, %v667
    %vm670 = vcmp.lt.s32.totalorder %v654, 0
    %v671 = vsub.s32 0, %v654
    %v672 = vsel %vm670, %v671, %v654
    %v673 = vshrl.u32 %v672, 4
    %v674 = vand.u32 %v672, 15
    %v675 = vsub.s32 0, %v674
    %v676 = vsel %vm670, %v675, %v674
    %vm677 = vcmp.lt.s32.totalorder %v655, 0
    %v678 = vsub.s32 0, %v655
    %v679 = vsel %vm677, %v678, %v655
    %v680 = vshrl.u32 %v679, 4
    %v681 = vand.u32 %v679, 15
    %v682 = vsub.s32 0, %v681
    %v683 = vsel %vm677, %v682, %v681
    %vm684 = vcmp.ne.s32.totalorder %v662, 0
    %vm685 = vcmp.ne.s32.totalorder %v669, 0
    %vm686 = vcmp.ne.s32.totalorder %v676, 0
    %vm687 = vcmp.ne.s32.totalorder %v683, 0
    %vm688 = vcmp.lt.s32.totalorder %v662, 0
    %vm689 = vcmp.lt.s32.totalorder %v669, 0
    %vm690 = vcmp.lt.s32.totalorder %v676, 0
    %vm691 = vcmp.lt.s32.totalorder %v683, 0
    %vm692 = vmand %vm688, %vm684
    %vm693 = vmand %vm689, %vm685
    %vm694 = vmand %vm690, %vm686
    %vm695 = vmand %vm691, %vm687
    %v696 = vadd.s32 %v662, 16
    %v697 = vadd.s32 %v669, 16
    %v698 = vadd.s32 %v676, 16
    %v699 = vadd.s32 %v683, 16
    %v700 = vsel %vm692, %v696, %v662
    %v701 = vsel %vm693, %v697, %v669
    %v702 = vsel %vm694, %v698, %v676
    %v703 = vsel %vm695, %v699, %v683
    %vm704 = vcmp.ne.s32.totalorder %v700, 0
    %vm705 = vcmp.ne.s32.totalorder %v701, 0
    %vm706 = vcmp.ne.s32.totalorder %v702, 0
    %vm707 = vcmp.ne.s32.totalorder %v703, 0
    %s708 = ssub.s32 %s122, 1
    %v709 = vstv %s708
    %vm710 = vcmp.lt.s32.totalorder %v700, %v709
    %vm711 = vcmp.lt.s32.totalorder %v701, %v709
    %vm712 = vcmp.lt.s32.totalorder %v702, %v709
    %vm713 = vcmp.lt.s32.totalorder %v703, %v709
    %v714 = vand.u32 2147483647, %v650
    %v715 = vand.u32 2147483647, %v651
    %v716 = vand.u32 2147483647, %v652
    %v717 = vand.u32 2147483647, %v653
    %v718 = vsel %vm140, %v714, 0.0
    %719 = vadd.xlane.f32.xlu0 %v718
    %v720 = vpop.xlane.xlu0 %719
    %v721 = vsel %vm140, %v715, 0.0
    %722 = vadd.xlane.f32.xlu0 %v721
    %v723 = vpop.xlane.xlu0 %722
    %v724 = vsel %vm140, %v716, 0.0
    %725 = vadd.xlane.f32.xlu0 %v724
    %v726 = vpop.xlane.xlu0 %725
    %v727 = vsel %vm140, %v717, 0.0
    %728 = vadd.xlane.f32.xlu0 %v727
    %v729 = vpop.xlane.xlu0 %728
    %vm730 = vcmp.gt.f32.partialorder %v720, 0.0
    %vm731 = vcmp.gt.f32.partialorder %v723, 0.0
    %vm732 = vcmp.gt.f32.partialorder %v726, 0.0
    %vm733 = vcmp.gt.f32.partialorder %v729, 0.0
    %v734 = vsel %vm730, 1, 0
    %v735 = vsel %vm731, 1, 0
    %v736 = vsel %vm732, 1, 0
    %v737 = vsel %vm733, 1, 0
    %v738 = vcvt.s32.f32 %v734
    %v739 = vcvt.s32.f32 %v735
    %v740 = vcvt.s32.f32 %v736
    %v741 = vcvt.s32.f32 %v737
    %v742 = vld [vmem:[%s5] sm:$0x1]
    %v743 = vld [vmem:[#allocation5] sm:$0x1]
    %v744 = vsel %vm140, %v650, 0.0
    %745 = vadd.xlane.f32.xlu0 %v744
    %v746 = vpop.xlane.xlu0 %745
    %v747 = vsel %vm140, %v651, 0.0
    %748 = vadd.xlane.f32.xlu0 %v747
    %v749 = vpop.xlane.xlu0 %748
    %v750 = vsel %vm140, %v652, 0.0
    %751 = vadd.xlane.f32.xlu0 %v750
    %v752 = vpop.xlane.xlu0 %751
    %v753 = vsel %vm140, %v653, 0.0
    %754 = vadd.xlane.f32.xlu0 %v753
    %v755 = vpop.xlane.xlu0 %754
    %v756 = vrcp.pop 32.0
    %v757 = vmul.f32 %v746, %v756
    %v758 = vmul.f32 %v749, %v756
    %v759 = vmul.f32 %v752, %v756
    %v760 = vmul.f32 %v755, %v756
    %v761 = vsub.f32 %v650, %v757
    %v762 = vsub.f32 %v651, %v758
    %v763 = vsub.f32 %v652, %v759
    %v764 = vsub.f32 %v653, %v760
    %v765 = vmul.f32 %v761, %v761
    %v766 = vmul.f32 %v762, %v762
    %v767 = vmul.f32 %v763, %v763
    %v768 = vmul.f32 %v764, %v764
    %v769 = vsel %vm140, %v765, 0.0
    %770 = vadd.xlane.f32.xlu0 %v769
    %v771 = vpop.xlane.xlu0 %770
    %v772 = vsel %vm140, %v766, 0.0
    %773 = vadd.xlane.f32.xlu0 %v772
    %v774 = vpop.xlane.xlu0 %773
    %v775 = vsel %vm140, %v767, 0.0
    %776 = vadd.xlane.f32.xlu0 %v775
    %v777 = vpop.xlane.xlu0 %776
    %v778 = vsel %vm140, %v768, 0.0
    %779 = vadd.xlane.f32.xlu0 %v778
    %v780 = vpop.xlane.xlu0 %779
    %v781 = vmul.f32 %v771, %v756
    %v782 = vmul.f32 %v774, %v756
    %v783 = vmul.f32 %v777, %v756
    %v784 = vmul.f32 %v780, %v756
    %v785 = vadd.f32 %v781, 1e-05
    %v786 = vadd.f32 %v782, 1e-05
    %v787 = vadd.f32 %v783, 1e-05
    %v788 = vadd.f32 %v784, 1e-05
    %v789 = vrsqrt.pop %v785
    %v790 = vrsqrt.pop %v786
    %v791 = vrsqrt.pop %v787
    %v792 = vrsqrt.pop %v788
    %v793 = vmul.f32 %v761, %v789
    %v794 = vmul.f32 %v762, %v790
    %v795 = vmul.f32 %v763, %v791
    %v796 = vmul.f32 %v764, %v792
    %v798 = vlaneseq
    %v799 = vshrl.u32 %v798, 7
    %v800 = vsub.s32 0, %v799
    %v801 = vrot.slane %v742, %v800
    %v803 = vmul.f32 %v793, %v801
    %v804 = vmul.f32 %v794, %v801
    %v805 = vmul.f32 %v795, %v801
    %v806 = vmul.f32 %v796, %v801
    %v808 = vlaneseq
    %v809 = vshrl.u32 %v808, 7
    %v810 = vsub.s32 0, %v809
    %v811 = vrot.slane %v743, %v810
    %v813 = vadd.f32 %v803, %v811
    %v814 = vadd.f32 %v804, %v811
    %v815 = vadd.f32 %v805, %v811
    %v816 = vadd.f32 %v806, %v811
    %v817 = vld [vmem:[#allocation8] sm:$0xff]
    %v818 = vld [vmem:[#allocation8 + $0x8] sm:$0xff]
    %v819 = vld [vmem:[#allocation8 + $0x10] sm:$0xff]
    %v820 = vld [vmem:[#allocation8 + $0x18] sm:$0xff]
    %v821 = vld [vmem:[#allocation8 + $0x20] sm:$0xff]
    %v822 = vld [vmem:[#allocation8 + $0x28] sm:$0xff]
    %v823 = vld [vmem:[#allocation8 + $0x30] sm:$0xff]
    %v824 = vld [vmem:[#allocation8 + $0x38] sm:$0xff]
    %v825 = vld [vmem:[#allocation8 + $0x40] sm:$0xff]
    %v826 = vld [vmem:[#allocation8 + $0x48] sm:$0xff]
    %v827 = vld [vmem:[#allocation8 + $0x50] sm:$0xff]
    %v828 = vld [vmem:[#allocation8 + $0x58] sm:$0xff]
    %v829 = vld [vmem:[#allocation10] sm:$0x1]
    %v830 = vrot.slane %v813, 7
    %v831 = vrot.slane %v814, 7
    %v832 = vrot.slane %v815, 7
    %v833 = vrot.slane %v816, 7
    %vm834 = vcmp.lt.s32.totalorder %v291, 1
    %v835 = vsel %vm834, %v832, %v833
    %v836 = vsel %vm834, %v831, %v832
    %v837 = vsel %vm834, %v830, %v831
    %v838 = vsel %vm834, %v833, %v830
    %v839 = vsel %vm704, 1, 0
    %v840 = vsel %vm705, 1, 0
    %v841 = vsel %vm706, 1, 0
    %v842 = vsel %vm707, 1, 0
    %vm843 = vcmp.eq.s32.totalorder %v839, 1
    %vm844 = vcmp.eq.s32.totalorder %v840, 1
    %vm845 = vcmp.eq.s32.totalorder %v841, 1
    %vm846 = vcmp.eq.s32.totalorder %v842, 1
    %v847 = vsel %vm843, %v838, 0.0
    %v848 = vsel %vm844, %v837, 0.0
    %v849 = vsel %vm845, %v836, 0.0
    %v850 = vsel %vm846, %v835, 0.0
    %v851 = vrot.slane %v813, 1
    %v852 = vrot.slane %v814, 1
    %v853 = vrot.slane %v815, 1
    %v854 = vrot.slane %v816, 1
    %vm855 = vcmp.lt.s32.totalorder %v291, 7
    %v856 = vsel %vm855, %v853, %v854
    %v857 = vsel %vm855, %v852, %v853
    %v858 = vsel %vm855, %v851, %v852
    %v859 = vsel %vm855, %v854, %v851
    %v860 = vsel %vm710, 1, 0
    %v861 = vsel %vm711, 1, 0
    %v862 = vsel %vm712, 1, 0
    %v863 = vsel %vm713, 1, 0
    %vm864 = vcmp.eq.s32.totalorder %v860, 1
    %vm865 = vcmp.eq.s32.totalorder %v861, 1
    %vm866 = vcmp.eq.s32.totalorder %v862, 1
    %vm867 = vcmp.eq.s32.totalorder %v863, 1
    %v868 = vsel %vm864, %v858, 0.0
    %v869 = vsel %vm865, %v857, 0.0
    %v870 = vsel %vm866, %v856, 0.0
    %v871 = vsel %vm867, %v859, 0.0
    %v873 = vsel %vm140, %v813, 0
    %v876 = vsel %vm140, %v814, 0
    %v879 = vsel %vm140, %v815, 0
    %v882 = vsel %vm140, %v816, 0
    %884 = vmatprep.subr.mxu0 0.0
    %885 = vmatpush1.msra.mxu0 %v821
    %886 = vmatprep.subr.mxu0 0.0
    %887 = vmatpush1.msra.mxu0 %v822
    %888 = vmatprep.subr.mxu0 0.0
    %889 = vmatpush1.msra.mxu0 %v823
    %890 = vmatprep.subr.mxu0 0.0
    %891 = vmatpush1.msra.mxu0 %v824
    %892 = vmatprep.subr.mxu0 0.0
    %893 = vmatpush1.msra.mxu0 0.0
    %894 = vmatprep.subr.mxu0 0.0
    %895 = vmatpush1.msra.mxu0 0.0
    %896 = vmatprep.subr.mxu0 0.0
    %897 = vmatpush1.msra.mxu0 0.0
    %898 = vmatprep.subr.mxu0 0.0
    %899 = vmatpush1.msra.mxu0 0.0
    %900 = vmatprep.subr.mxu0 0.0
    %901 = vmatpush1.msra.mxu0 0.0
    %902 = vmatprep.subr.mxu0 0.0
    %903 = vmatpush1.msra.mxu0 0.0
    %904 = vmatprep.subr.mxu0 0.0
    %905 = vmatpush1.msra.mxu0 0.0
    %906 = vmatprep.subr.mxu0 0.0
    %907 = vmatpush1.msra.mxu0 0.0
    %908 = vmatprep.subr.mxu0 0.0
    %909 = vmatpush1.msra.mxu0 0.0
    %910 = vmatprep.subr.mxu0 0.0
    %911 = vmatpush1.msra.mxu0 0.0
    %912 = vmatprep.subr.mxu0 0.0
    %913 = vmatpush1.msra.mxu0 0.0
    %914 = vmatprep.subr.mxu0 0.0
    %915 = vmatpush1.msra.mxu0 0.0
    %916 = vmatprep.subr.mxu0 0.0
    %917 = vmatpush1.msra.mxu0 0.0
    %918 = vmatprep.subr.mxu0 0.0
    %919 = vmatpush1.msra.mxu0 0.0
    %920 = vmatprep.subr.mxu0 0.0
    %921 = vmatpush1.msra.mxu0 0.0
    %922 = vmatprep.subr.mxu0 0.0
    %923 = vmatpush1.msra.mxu0 0.0
    %924 = vmatprep.subr.mxu0 0.0
    %925 = vmatpush1.msra.mxu0 0.0
    %926 = vmatprep.subr.mxu0 0.0
    %927 = vmatpush1.msra.mxu0 0.0
    %928 = vmatprep.subr.mxu0 0.0
    %929 = vmatpush1.msra.mxu0 0.0
    %930 = vmatprep.subr.mxu0 0.0
    %931 = vmatpush1.msra.mxu0 0.0
    %932 = vmatprep.subr.mxu0 0.0
    %933 = vmatpush1.msra.mxu0 0.0
    %934 = vmatprep.subr.mxu0 0.0
    %935 = vmatpush1.msra.mxu0 0.0
    %936 = vmatprep.subr.mxu0 0.0
    %937 = vmatpush1.msra.mxu0 0.0
    %938 = vmatprep.subr.mxu0 0.0
    %939 = vmatpush1.msra.mxu0 0.0
    %940 = vmatprep.subr.mxu0 0.0
    %941 = vmatpush1.msra.mxu0 0.0
    %942 = vmatprep.subr.mxu0 0.0
    %943 = vmatpush1.msra.mxu0 0.0
    %944 = vmatprep.subr.mxu0 0.0
    %945 = vmatpush1.msra.mxu0 0.0
    %946 = vmatprep.subr.mxu0 0.0
    %947 = vmatpush1.msra.mxu0 0.0
    %948 = vmatprep.mubr.f32.mxu0 0.0
    %949 = vmatmul.mubr.f32.gmra.mrb[0].mxu0 %v873
    %v950 = vpop.f32.mrb[0].mxu0
    %v951 = vadd.f32 0.0, %v950
    %v952 = vpop.f32.mrb[0].mxu0
    %953 = vmatprep.mubr.f32.mxu0 0.0
    %954 = vmatmul.mubr.f32.gmra.mrb[0].mxu0 %v876
    %v955 = vpop.f32.mrb[0].mxu0
    %v956 = vadd.f32 0.0, %v955
    %v957 = vpop.f32.mrb[0].mxu0
    %958 = vmatprep.mubr.f32.mxu0 0.0
    %959 = vmatmul.mubr.f32.gmra.mrb[0].mxu0 %v879
    %v960 = vpop.f32.mrb[0].mxu0
    %v961 = vadd.f32 0.0, %v960
    %v962 = vpop.f32.mrb[0].mxu0
    %963 = vmatprep.mubr.f32.mxu0 0.0
    %964 = vmatmul.mubr.f32.gmra.mrb[0].mxu0 %v882
    %v965 = vpop.f32.mrb[0].mxu0
    %v966 = vadd.f32 0.0, %v965
    %v967 = vpop.f32.mrb[0].mxu0
    %968 = vdwg.mxu0
    %v970 = vsel %vm140, %v847, 0
    %v973 = vsel %vm140, %v848, 0
    %v976 = vsel %vm140, %v849, 0
    %v979 = vsel %vm140, %v850, 0
    %981 = vmatprep.subr.mxu0 0.0
    %982 = vmatpush1.msra.mxu0 %v817
    %983 = vmatprep.subr.mxu0 0.0
    %984 = vmatpush1.msra.mxu0 %v818
    %985 = vmatprep.subr.mxu0 0.0
    %986 = vmatpush1.msra.mxu0 %v819
    %987 = vmatprep.subr.mxu0 0.0
    %988 = vmatpush1.msra.mxu0 %v820
    %989 = vmatprep.subr.mxu0 0.0
    %990 = vmatpush1.msra.mxu0 0.0
    %991 = vmatprep.subr.mxu0 0.0
    %992 = vmatpush1.msra.mxu0 0.0
    %993 = vmatprep.subr.mxu0 0.0
    %994 = vmatpush1.msra.mxu0 0.0
    %995 = vmatprep.subr.mxu0 0.0
    %996 = vmatpush1.msra.mxu0 0.0
    %997 = vmatprep.subr.mxu0 0.0
    %998 = vmatpush1.msra.mxu0 0.0
    %999 = vmatprep.subr.mxu0 0.0
    %1000 = vmatpush1.msra.mxu0 0.0
    %1001 = vmatprep.subr.mxu0 0.0
    %1002 = vmatpush1.msra.mxu0 0.0
    %1003 = vmatprep.subr.mxu0 0.0
    %1004 = vmatpush1.msra.mxu0 0.0
    %1005 = vmatprep.subr.mxu0 0.0
    %1006 = vmatpush1.msra.mxu0 0.0
    %1007 = vmatprep.subr.mxu0 0.0
    %1008 = vmatpush1.msra.mxu0 0.0
    %1009 = vmatprep.subr.mxu0 0.0
    %1010 = vmatpush1.msra.mxu0 0.0
    %1011 = vmatprep.subr.mxu0 0.0
    %1012 = vmatpush1.msra.mxu0 0.0
    %1013 = vmatprep.subr.mxu0 0.0
    %1014 = vmatpush1.msra.mxu0 0.0
    %1015 = vmatprep.subr.mxu0 0.0
    %1016 = vmatpush1.msra.mxu0 0.0
    %1017 = vmatprep.subr.mxu0 0.0
    %1018 = vmatpush1.msra.mxu0 0.0
    %1019 = vmatprep.subr.mxu0 0.0
    %1020 = vmatpush1.msra.mxu0 0.0
    %1021 = vmatprep.subr.mxu0 0.0
    %1022 = vmatpush1.msra.mxu0 0.0
    %1023 = vmatprep.subr.mxu0 0.0
    %1024 = vmatpush1.msra.mxu0 0.0
    %1025 = vmatprep.subr.mxu0 0.0
    %1026 = vmatpush1.msra.mxu0 0.0
    %1027 = vmatprep.subr.mxu0 0.0
    %1028 = vmatpush1.msra.mxu0 0.0
    %1029 = vmatprep.subr.mxu0 0.0
    %1030 = vmatpush1.msra.mxu0 0.0
    %1031 = vmatprep.subr.mxu0 0.0
    %1032 = vmatpush1.msra.mxu0 0.0
    %1033 = vmatprep.subr.mxu0 0.0
    %1034 = vmatpush1.msra.mxu0 0.0
    %1035 = vmatprep.subr.mxu0 0.0
    %1036 = vmatpush1.msra.mxu0 0.0
    %1037 = vmatprep.subr.mxu0 0.0
    %1038 = vmatpush1.msra.mxu0 0.0
    %1039 = vmatprep.subr.mxu0 0.0
    %1040 = vmatpush1.msra.mxu0 0.0
    %1041 = vmatprep.subr.mxu0 0.0
    %1042 = vmatpush1.msra.mxu0 0.0
    %1043 = vmatprep.subr.mxu0 0.0
    %1044 = vmatpush1.msra.mxu0 0.0
    %1045 = vmatprep.mubr.f32.mxu0 0.0
    %1046 = vmatmul.mubr.f32.gmra.mrb[0].mxu0 %v970
    %v1047 = vpop.f32.mrb[0].mxu0
    %v1048 = vadd.f32 %v951, %v1047
    %v1049 = vpop.f32.mrb[0].mxu0
    %1050 = vmatprep.mubr.f32.mxu0 0.0
    %1051 = vmatmul.mubr.f32.gmra.mrb[0].mxu0 %v973
    %v1052 = vpop.f32.mrb[0].mxu0
    %v1053 = vadd.f32 %v956, %v1052
    %v1054 = vpop.f32.mrb[0].mxu0
    %1055 = vmatprep.mubr.f32.mxu0 0.0
    %1056 = vmatmul.mubr.f32.gmra.mrb[0].mxu0 %v976
    %v1057 = vpop.f32.mrb[0].mxu0
    %v1058 = vadd.f32 %v961, %v1057
    %v1059 = vpop.f32.mrb[0].mxu0
    %1060 = vmatprep.mubr.f32.mxu0 0.0
    %1061 = vmatmul.mubr.f32.gmra.mrb[0].mxu0 %v979
    %v1062 = vpop.f32.mrb[0].mxu0
    %v1063 = vadd.f32 %v966, %v1062
    %v1064 = vpop.f32.mrb[0].mxu0
    %1065 = vdwg.mxu0
    %v1067 = vsel %vm140, %v868, 0
    %v1070 = vsel %vm140, %v869, 0
    %v1073 = vsel %vm140, %v870, 0
    %v1076 = vsel %vm140, %v871, 0
    %1078 = vmatprep.subr.mxu0 0.0
    %1079 = vmatpush1.msra.mxu0 %v825
    %1080 = vmatprep.subr.mxu0 0.0
    %1081 = vmatpush1.msra.mxu0 %v826
    %1082 = vmatprep.subr.mxu0 0.0
    %1083 = vmatpush1.msra.mxu0 %v827
    %1084 = vmatprep.subr.mxu0 0.0
    %1085 = vmatpush1.msra.mxu0 %v828
    %1086 = vmatprep.subr.mxu0 0.0
    %1087 = vmatpush1.msra.mxu0 0.0
    %1088 = vmatprep.subr.mxu0 0.0
    %1089 = vmatpush1.msra.mxu0 0.0
    %1090 = vmatprep.subr.mxu0 0.0
    %1091 = vmatpush1.msra.mxu0 0.0
    %1092 = vmatprep.subr.mxu0 0.0
    %1093 = vmatpush1.msra.mxu0 0.0
    %1094 = vmatprep.subr.mxu0 0.0
    %1095 = vmatpush1.msra.mxu0 0.0
    %1096 = vmatprep.subr.mxu0 0.0
    %1097 = vmatpush1.msra.mxu0 0.0
    %1098 = vmatprep.subr.mxu0 0.0
    %1099 = vmatpush1.msra.mxu0 0.0
    %1100 = vmatprep.subr.mxu0 0.0
    %1101 = vmatpush1.msra.mxu0 0.0
    %1102 = vmatprep.subr.mxu0 0.0
    %1103 = vmatpush1.msra.mxu0 0.0
    %1104 = vmatprep.subr.mxu0 0.0
    %1105 = vmatpush1.msra.mxu0 0.0
    %1106 = vmatprep.subr.mxu0 0.0
    %1107 = vmatpush1.msra.mxu0 0.0
    %1108 = vmatprep.subr.mxu0 0.0
    %1109 = vmatpush1.msra.mxu0 0.0
    %1110 = vmatprep.subr.mxu0 0.0
    %1111 = vmatpush1.msra.mxu0 0.0
    %1112 = vmatprep.subr.mxu0 0.0
    %1113 = vmatpush1.msra.mxu0 0.0
    %1114 = vmatprep.subr.mxu0 0.0
    %1115 = vmatpush1.msra.mxu0 0.0
    %1116 = vmatprep.subr.mxu0 0.0
    %1117 = vmatpush1.msra.mxu0 0.0
    %1118 = vmatprep.subr.mxu0 0.0
    %1119 = vmatpush1.msra.mxu0 0.0
    %1120 = vmatprep.subr.mxu0 0.0
    %1121 = vmatpush1.msra.mxu0 0.0
    %1122 = vmatprep.subr.mxu0 0.0
    %1123 = vmatpush1.msra.mxu0 0.0
    %1124 = vmatprep.subr.mxu0 0.0
    %1125 = vmatpush1.msra.mxu0 0.0
    %1126 = vmatprep.subr.mxu0 0.0
    %1127 = vmatpush1.msra.mxu0 0.0
    %1128 = vmatprep.subr.mxu0 0.0
    %1129 = vmatpush1.msra.mxu0 0.0
    %1130 = vmatprep.subr.mxu0 0.0
    %1131 = vmatpush1.msra.mxu0 0.0
    %1132 = vmatprep.subr.mxu0 0.0
    %1133 = vmatpush1.msra.mxu0 0.0
    %1134 = vmatprep.subr.mxu0 0.0
    %1135 = vmatpush1.msra.mxu0 0.0
    %1136 = vmatprep.subr.mxu0 0.0
    %1137 = vmatpush1.msra.mxu0 0.0
    %1138 = vmatprep.subr.mxu0 0.0
    %1139 = vmatpush1.msra.mxu0 0.0
    %1140 = vmatprep.subr.mxu0 0.0
    %1141 = vmatpush1.msra.mxu0 0.0
    %1142 = vmatprep.mubr.f32.mxu0 0.0
    %1143 = vmatmul.mubr.f32.gmra.mrb[0].mxu0 %v1067
    %v1144 = vpop.f32.mrb[0].mxu0
    %v1145 = vadd.f32 0.0, %v1144
    %v1146 = vpop.f32.mrb[0].mxu0
    %1147 = vmatprep.mubr.f32.mxu0 0.0
    %1148 = vmatmul.mubr.f32.gmra.mrb[0].mxu0 %v1070
    %v1149 = vpop.f32.mrb[0].mxu0
    %v1150 = vadd.f32 0.0, %v1149
    %v1151 = vpop.f32.mrb[0].mxu0
    %1152 = vmatprep.mubr.f32.mxu0 0.0
    %1153 = vmatmul.mubr.f32.gmra.mrb[0].mxu0 %v1073
    %v1154 = vpop.f32.mrb[0].mxu0
    %v1155 = vadd.f32 0.0, %v1154
    %v1156 = vpop.f32.mrb[0].mxu0
    %1157 = vmatprep.mubr.f32.mxu0 0.0
    %1158 = vmatmul.mubr.f32.gmra.mrb[0].mxu0 %v1076
    %v1159 = vpop.f32.mrb[0].mxu0
    %v1160 = vadd.f32 0.0, %v1159
    %v1161 = vpop.f32.mrb[0].mxu0
    %1162 = vdwg.mxu0
    %v1163 = vadd.f32 %v1048, %v1145
    %v1164 = vadd.f32 %v1053, %v1150
    %v1165 = vadd.f32 %v1058, %v1155
    %v1166 = vadd.f32 %v1063, %v1160
    %v1168 = vlaneseq
    %v1169 = vshrl.u32 %v1168, 7
    %v1170 = vsub.s32 0, %v1169
    %v1171 = vrot.slane %v829, %v1170
    %v1173 = vadd.f32 %v1163, %v1171
    %v1174 = vadd.f32 %v1164, %v1171
    %v1175 = vadd.f32 %v1165, %v1171
    %v1176 = vadd.f32 %v1166, %v1171
    %v1177 = vmul.f32 %v1173, 0.57735026
    %v1178 = vmul.f32 %v1174, 0.57735026
    %v1179 = vmul.f32 %v1175, 0.57735026
    %v1180 = vmul.f32 %v1176, 0.57735026
    %v1181 = vxor.u32 %v1177, 2147483648
    %v1182 = vxor.u32 %v1178, 2147483648
    %v1183 = vxor.u32 %v1179, 2147483648
    %v1184 = vxor.u32 %v1180, 2147483648
    %v1185 = vmul.f32 %v1181, 1.442695
    %v1186 = vpow.pop %v1185
    %v1187 = vmul.f32 %v1182, 1.442695
    %v1188 = vpow.pop %v1187
    %v1189 = vmul.f32 %v1183, 1.442695
    %v1190 = vpow.pop %v1189
    %v1191 = vmul.f32 %v1184, 1.442695
    %v1192 = vpow.pop %v1191
    %v1193 = vadd.f32 %v1186, 1.0
    %v1194 = vadd.f32 %v1188, 1.0
    %v1195 = vadd.f32 %v1190, 1.0
    %v1196 = vadd.f32 %v1192, 1.0
    %v1197 = vrcp.pop %v1193
    %v1198 = vmul.f32 1.0, %v1197
    %v1199 = vrcp.pop %v1194
    %v1200 = vmul.f32 1.0, %v1199
    %v1201 = vrcp.pop %v1195
    %v1202 = vmul.f32 1.0, %v1201
    %v1203 = vrcp.pop %v1196
    %v1204 = vmul.f32 1.0, %v1203
    %v1205 = vmul.f32 %v1177, %v1198
    %v1206 = vmul.f32 %v1178, %v1200
    %v1207 = vmul.f32 %v1179, %v1202
    %v1208 = vmul.f32 %v1180, %v1204
    %v1209 = vld [vmem:[%s9] sm:$0xff]
    %v1210 = vld [vmem:[%s9 + $0x8] sm:$0xff]
    %v1211 = vld [vmem:[%s9 + $0x10] sm:$0xff]
    %v1212 = vld [vmem:[%s9 + $0x18] sm:$0xff]
    %v1213 = vld [vmem:[%s10] sm:$0x1]
    %v1215 = vlaneseq
    %v1216 = vshrl.u32 %v1215, 7
    %v1217 = vsub.s32 0, %v1216
    %v1218 = vrot.slane %v1213, %v1217
    %v1221 = vsel %vm140, %v1205, 0
    %v1224 = vsel %vm140, %v1206, 0
    %v1227 = vsel %vm140, %v1207, 0
    %v1230 = vsel %vm140, %v1208, 0
    %1232 = vmatprep.subr.mxu0 0.0
    %1233 = vmatpush1.msra.mxu0 %v1209
    %1234 = vmatprep.subr.mxu0 0.0
    %1235 = vmatpush1.msra.mxu0 %v1210
    %1236 = vmatprep.subr.mxu0 0.0
    %1237 = vmatpush1.msra.mxu0 %v1211
    %1238 = vmatprep.subr.mxu0 0.0
    %1239 = vmatpush1.msra.mxu0 %v1212
    %1240 = vmatprep.subr.mxu0 0.0
    %1241 = vmatpush1.msra.mxu0 0.0
    %1242 = vmatprep.subr.mxu0 0.0
    %1243 = vmatpush1.msra.mxu0 0.0
    %1244 = vmatprep.subr.mxu0 0.0
    %1245 = vmatpush1.msra.mxu0 0.0
    %1246 = vmatprep.subr.mxu0 0.0
    %1247 = vmatpush1.msra.mxu0 0.0
    %1248 = vmatprep.subr.mxu0 0.0
    %1249 = vmatpush1.msra.mxu0 0.0
    %1250 = vmatprep.subr.mxu0 0.0
    %1251 = vmatpush1.msra.mxu0 0.0
    %1252 = vmatprep.subr.mxu0 0.0
    %1253 = vmatpush1.msra.mxu0 0.0
    %1254 = vmatprep.subr.mxu0 0.0
    %1255 = vmatpush1.msra.mxu0 0.0
    %1256 = vmatprep.subr.mxu0 0.0
    %1257 = vmatpush1.msra.mxu0 0.0
    %1258 = vmatprep.subr.mxu0 0.0
    %1259 = vmatpush1.msra.mxu0 0.0
    %1260 = vmatprep.subr.mxu0 0.0
    %1261 = vmatpush1.msra.mxu0 0.0
    %1262 = vmatprep.subr.mxu0 0.0
    %1263 = vmatpush1.msra.mxu0 0.0
    %1264 = vmatprep.subr.mxu0 0.0
    %1265 = vmatpush1.msra.mxu0 0.0
    %1266 = vmatprep.subr.mxu0 0.0
    %1267 = vmatpush1.msra.mxu0 0.0
    %1268 = vmatprep.subr.mxu0 0.0
    %1269 = vmatpush1.msra.mxu0 0.0
    %1270 = vmatprep.subr.mxu0 0.0
    %1271 = vmatpush1.msra.mxu0 0.0
    %1272 = vmatprep.subr.mxu0 0.0
    %1273 = vmatpush1.msra.mxu0 0.0
    %1274 = vmatprep.subr.mxu0 0.0
    %1275 = vmatpush1.msra.mxu0 0.0
    %1276 = vmatprep.subr.mxu0 0.0
    %1277 = vmatpush1.msra.mxu0 0.0
    %1278 = vmatprep.subr.mxu0 0.0
    %1279 = vmatpush1.msra.mxu0 0.0
    %1280 = vmatprep.subr.mxu0 0.0
    %1281 = vmatpush1.msra.mxu0 0.0
    %1282 = vmatprep.subr.mxu0 0.0
    %1283 = vmatpush1.msra.mxu0 0.0
    %1284 = vmatprep.subr.mxu0 0.0
    %1285 = vmatpush1.msra.mxu0 0.0
    %1286 = vmatprep.subr.mxu0 0.0
    %1287 = vmatpush1.msra.mxu0 0.0
    %1288 = vmatprep.subr.mxu0 0.0
    %1289 = vmatpush1.msra.mxu0 0.0
    %1290 = vmatprep.subr.mxu0 0.0
    %1291 = vmatpush1.msra.mxu0 0.0
    %1292 = vmatprep.subr.mxu0 0.0
    %1293 = vmatpush1.msra.mxu0 0.0
    %1294 = vmatprep.subr.mxu0 0.0
    %1295 = vmatpush1.msra.mxu0 0.0
    %1296 = vmatprep.mubr.f32.mxu0 0.0
    %1297 = vmatmul.mubr.f32.gmra.mrb[0].mxu0 %v1221
    %v1298 = vpop.f32.mrb[0].mxu0
    %v1299 = vadd.f32 %v1218, %v1298
    %v1300 = vpop.f32.mrb[0].mxu0
    %1301 = vmatprep.mubr.f32.mxu0 0.0
    %1302 = vmatmul.mubr.f32.gmra.mrb[0].mxu0 %v1224
    %v1303 = vpop.f32.mrb[0].mxu0
    %v1304 = vadd.f32 %v1218, %v1303
    %v1305 = vpop.f32.mrb[0].mxu0
    %1306 = vmatprep.mubr.f32.mxu0 0.0
    %1307 = vmatmul.mubr.f32.gmra.mrb[0].mxu0 %v1227
    %v1308 = vpop.f32.mrb[0].mxu0
    %v1309 = vadd.f32 %v1218, %v1308
    %v1310 = vpop.f32.mrb[0].mxu0
    %1311 = vmatprep.mubr.f32.mxu0 0.0
    %1312 = vmatmul.mubr.f32.gmra.mrb[0].mxu0 %v1230
    %v1313 = vpop.f32.mrb[0].mxu0
    %v1314 = vadd.f32 %v1218, %v1313
    %v1315 = vpop.f32.mrb[0].mxu0
    %1316 = vdwg.mxu0
    %v1317 = vadd.f32 %v650, %v1299
    %v1318 = vadd.f32 %v651, %v1304
    %v1319 = vadd.f32 %v652, %v1309
    %v1320 = vadd.f32 %v653, %v1314
    %v1321 = vmul.f32 %v1317, %v738
    %v1322 = vmul.f32 %v1318, %v739
    %v1323 = vmul.f32 %v1319, %v740
    %v1324 = vmul.f32 %v1320, %v741
    %v1325 = vmul.f32 %v1321, %v738
    %v1326 = vmul.f32 %v1322, %v739
    %v1327 = vmul.f32 %v1323, %v740
    %v1328 = vmul.f32 %v1324, %v741
    %v1329 = vld [vmem:[%s11] sm:$0x1]
    %v1330 = vld [vmem:[%s12] sm:$0x1]
    %v1331 = vsel %vm140, %v1325, 0.0
    %1332 = vadd.xlane.f32.xlu0 %v1331
    %v1333 = vpop.xlane.xlu0 %1332
    %v1334 = vsel %vm140, %v1326, 0.0
    %1335 = vadd.xlane.f32.xlu0 %v1334
    %v1336 = vpop.xlane.xlu0 %1335
    %v1337 = vsel %vm140, %v1327, 0.0
    %1338 = vadd.xlane.f32.xlu0 %v1337
    %v1339 = vpop.xlane.xlu0 %1338
    %v1340 = vsel %vm140, %v1328, 0.0
    %1341 = vadd.xlane.f32.xlu0 %v1340
    %v1342 = vpop.xlane.xlu0 %1341
    %v1343 = vmul.f32 %v1333, %v756
    %v1344 = vmul.f32 %v1336, %v756
    %v1345 = vmul.f32 %v1339, %v756
    %v1346 = vmul.f32 %v1342, %v756
    %v1347 = vsub.f32 %v1325, %v1343
    %v1348 = vsub.f32 %v1326, %v1344
    %v1349 = vsub.f32 %v1327, %v1345
    %v1350 = vsub.f32 %v1328, %v1346
    %v1351 = vmul.f32 %v1347, %v1347
    %v1352 = vmul.f32 %v1348, %v1348
    %v1353 = vmul.f32 %v1349, %v1349
    %v1354 = vmul.f32 %v1350, %v1350
    %v1355 = vsel %vm140, %v1351, 0.0
    %1356 = vadd.xlane.f32.xlu0 %v1355
    %v1357 = vpop.xlane.xlu0 %1356
    %v1358 = vsel %vm140, %v1352, 0.0
    %1359 = vadd.xlane.f32.xlu0 %v1358
    %v1360 = vpop.xlane.xlu0 %1359
    %v1361 = vsel %vm140, %v1353, 0.0
    %1362 = vadd.xlane.f32.xlu0 %v1361
    %v1363 = vpop.xlane.xlu0 %1362
    %v1364 = vsel %vm140, %v1354, 0.0
    %1365 = vadd.xlane.f32.xlu0 %v1364
    %v1366 = vpop.xlane.xlu0 %1365
    %v1367 = vmul.f32 %v1357, %v756
    %v1368 = vmul.f32 %v1360, %v756
    %v1369 = vmul.f32 %v1363, %v756
    %v1370 = vmul.f32 %v1366, %v756
    %v1371 = vadd.f32 %v1367, 1e-05
    %v1372 = vadd.f32 %v1368, 1e-05
    %v1373 = vadd.f32 %v1369, 1e-05
    %v1374 = vadd.f32 %v1370, 1e-05
    %v1375 = vrsqrt.pop %v1371
    %v1376 = vrsqrt.pop %v1372
    %v1377 = vrsqrt.pop %v1373
    %v1378 = vrsqrt.pop %v1374
    %v1379 = vmul.f32 %v1347, %v1375
    %v1380 = vmul.f32 %v1348, %v1376
    %v1381 = vmul.f32 %v1349, %v1377
    %v1382 = vmul.f32 %v1350, %v1378
    %v1384 = vlaneseq
    %v1385 = vshrl.u32 %v1384, 7
    %v1386 = vsub.s32 0, %v1385
    %v1387 = vrot.slane %v1329, %v1386
    %v1389 = vmul.f32 %v1379, %v1387
    %v1390 = vmul.f32 %v1380, %v1387
    %v1391 = vmul.f32 %v1381, %v1387
    %v1392 = vmul.f32 %v1382, %v1387
    %v1394 = vlaneseq
    %v1395 = vshrl.u32 %v1394, 7
    %v1396 = vsub.s32 0, %v1395
    %v1397 = vrot.slane %v1330, %v1396
    %v1399 = vadd.f32 %v1389, %v1397
    %v1400 = vadd.f32 %v1390, %v1397
    %v1401 = vadd.f32 %v1391, %v1397
    %v1402 = vadd.f32 %v1392, %v1397
    %v1403 = vmul.f32 %v1399, %v738
    %v1404 = vmul.f32 %v1400, %v739
    %v1405 = vmul.f32 %v1401, %v740
    %v1406 = vmul.f32 %v1402, %v741
    %v1407 = vld [vmem:[#allocation11] sm:$0xff]
    %v1408 = vld [vmem:[#allocation11 + $0x8] sm:$0xff]
    %v1409 = vld [vmem:[#allocation11 + $0x10] sm:$0xff]
    %v1410 = vld [vmem:[#allocation11 + $0x18] sm:$0xff]
    %v1411 = vld [vmem:[#allocation11 + $0x20] sm:$0xff]
    %v1412 = vld [vmem:[#allocation11 + $0x28] sm:$0xff]
    %v1413 = vld [vmem:[#allocation11 + $0x30] sm:$0xff]
    %v1414 = vld [vmem:[#allocation11 + $0x38] sm:$0xff]
    %v1415 = vld [vmem:[#allocation11 + $0x40] sm:$0xff]
    %v1416 = vld [vmem:[#allocation11 + $0x48] sm:$0xff]
    %v1417 = vld [vmem:[#allocation11 + $0x50] sm:$0xff]
    %v1418 = vld [vmem:[#allocation11 + $0x58] sm:$0xff]
    %v1419 = vld [vmem:[%s14] sm:$0x1]
    %v1420 = vrot.slane %v1403, 7
    %v1421 = vrot.slane %v1404, 7
    %v1422 = vrot.slane %v1405, 7
    %v1423 = vrot.slane %v1406, 7
    %v1424 = vsel %vm834, %v1422, %v1423
    %v1425 = vsel %vm834, %v1421, %v1422
    %v1426 = vsel %vm834, %v1420, %v1421
    %v1427 = vsel %vm834, %v1423, %v1420
    %v1428 = vsel %vm843, %v1427, 0.0
    %v1429 = vsel %vm844, %v1426, 0.0
    %v1430 = vsel %vm845, %v1425, 0.0
    %v1431 = vsel %vm846, %v1424, 0.0
    %v1432 = vrot.slane %v1403, 1
    %v1433 = vrot.slane %v1404, 1
    %v1434 = vrot.slane %v1405, 1
    %v1435 = vrot.slane %v1406, 1
    %v1436 = vsel %vm855, %v1434, %v1435
    %v1437 = vsel %vm855, %v1433, %v1434
    %v1438 = vsel %vm855, %v1432, %v1433
    %v1439 = vsel %vm855, %v1435, %v1432
    %v1440 = vsel %vm864, %v1438, 0.0
    %v1441 = vsel %vm865, %v1437, 0.0
    %v1442 = vsel %vm866, %v1436, 0.0
    %v1443 = vsel %vm867, %v1439, 0.0
    %v1445 = vsel %vm140, %v1403, 0
    %v1448 = vsel %vm140, %v1404, 0
    %v1451 = vsel %vm140, %v1405, 0
    %v1454 = vsel %vm140, %v1406, 0
    %1456 = vmatprep.subr.mxu0 0.0
    %1457 = vmatpush1.msra.mxu0 %v1411
    %1458 = vmatprep.subr.mxu0 0.0
    %1459 = vmatpush1.msra.mxu0 %v1412
    %1460 = vmatprep.subr.mxu0 0.0
    %1461 = vmatpush1.msra.mxu0 %v1413
    %1462 = vmatprep.subr.mxu0 0.0
    %1463 = vmatpush1.msra.mxu0 %v1414
    %1464 = vmatprep.subr.mxu0 0.0
    %1465 = vmatpush1.msra.mxu0 0.0
    %1466 = vmatprep.subr.mxu0 0.0
    %1467 = vmatpush1.msra.mxu0 0.0
    %1468 = vmatprep.subr.mxu0 0.0
    %1469 = vmatpush1.msra.mxu0 0.0
    %1470 = vmatprep.subr.mxu0 0.0
    %1471 = vmatpush1.msra.mxu0 0.0
    %1472 = vmatprep.subr.mxu0 0.0
    %1473 = vmatpush1.msra.mxu0 0.0
    %1474 = vmatprep.subr.mxu0 0.0
    %1475 = vmatpush1.msra.mxu0 0.0
    %1476 = vmatprep.subr.mxu0 0.0
    %1477 = vmatpush1.msra.mxu0 0.0
    %1478 = vmatprep.subr.mxu0 0.0
    %1479 = vmatpush1.msra.mxu0 0.0
    %1480 = vmatprep.subr.mxu0 0.0
    %1481 = vmatpush1.msra.mxu0 0.0
    %1482 = vmatprep.subr.mxu0 0.0
    %1483 = vmatpush1.msra.mxu0 0.0
    %1484 = vmatprep.subr.mxu0 0.0
    %1485 = vmatpush1.msra.mxu0 0.0
    %1486 = vmatprep.subr.mxu0 0.0
    %1487 = vmatpush1.msra.mxu0 0.0
    %1488 = vmatprep.subr.mxu0 0.0
    %1489 = vmatpush1.msra.mxu0 0.0
    %1490 = vmatprep.subr.mxu0 0.0
    %1491 = vmatpush1.msra.mxu0 0.0
    %1492 = vmatprep.subr.mxu0 0.0
    %1493 = vmatpush1.msra.mxu0 0.0
    %1494 = vmatprep.subr.mxu0 0.0
    %1495 = vmatpush1.msra.mxu0 0.0
    %1496 = vmatprep.subr.mxu0 0.0
    %1497 = vmatpush1.msra.mxu0 0.0
    %1498 = vmatprep.subr.mxu0 0.0
    %1499 = vmatpush1.msra.mxu0 0.0
    %1500 = vmatprep.subr.mxu0 0.0
    %1501 = vmatpush1.msra.mxu0 0.0
    %1502 = vmatprep.subr.mxu0 0.0
    %1503 = vmatpush1.msra.mxu0 0.0
    %1504 = vmatprep.subr.mxu0 0.0
    %1505 = vmatpush1.msra.mxu0 0.0
    %1506 = vmatprep.subr.mxu0 0.0
    %1507 = vmatpush1.msra.mxu0 0.0
    %1508 = vmatprep.subr.mxu0 0.0
    %1509 = vmatpush1.msra.mxu0 0.0
    %1510 = vmatprep.subr.mxu0 0.0
    %1511 = vmatpush1.msra.mxu0 0.0
    %1512 = vmatprep.subr.mxu0 0.0
    %1513 = vmatpush1.msra.mxu0 0.0
    %1514 = vmatprep.subr.mxu0 0.0
    %1515 = vmatpush1.msra.mxu0 0.0
    %1516 = vmatprep.subr.mxu0 0.0
    %1517 = vmatpush1.msra.mxu0 0.0
    %1518 = vmatprep.subr.mxu0 0.0
    %1519 = vmatpush1.msra.mxu0 0.0
    %1520 = vmatprep.mubr.f32.mxu0 0.0
    %1521 = vmatmul.mubr.f32.gmra.mrb[0].mxu0 %v1445
    %v1522 = vpop.f32.mrb[0].mxu0
    %v1523 = vadd.f32 0.0, %v1522
    %v1524 = vpop.f32.mrb[0].mxu0
    %1525 = vmatprep.mubr.f32.mxu0 0.0
    %1526 = vmatmul.mubr.f32.gmra.mrb[0].mxu0 %v1448
    %v1527 = vpop.f32.mrb[0].mxu0
    %v1528 = vadd.f32 0.0, %v1527
    %v1529 = vpop.f32.mrb[0].mxu0
    %1530 = vmatprep.mubr.f32.mxu0 0.0
    %1531 = vmatmul.mubr.f32.gmra.mrb[0].mxu0 %v1451
    %v1532 = vpop.f32.mrb[0].mxu0
    %v1533 = vadd.f32 0.0, %v1532
    %v1534 = vpop.f32.mrb[0].mxu0
    %1535 = vmatprep.mubr.f32.mxu0 0.0
    %1536 = vmatmul.mubr.f32.gmra.mrb[0].mxu0 %v1454
    %v1537 = vpop.f32.mrb[0].mxu0
    %v1538 = vadd.f32 0.0, %v1537
    %v1539 = vpop.f32.mrb[0].mxu0
    %1540 = vdwg.mxu0
    %v1542 = vsel %vm140, %v1428, 0
    %v1545 = vsel %vm140, %v1429, 0
    %v1548 = vsel %vm140, %v1430, 0
    %v1551 = vsel %vm140, %v1431, 0
    %1553 = vmatprep.subr.mxu0 0.0
    %1554 = vmatpush1.msra.mxu0 %v1407
    %1555 = vmatprep.subr.mxu0 0.0
    %1556 = vmatpush1.msra.mxu0 %v1408
    %1557 = vmatprep.subr.mxu0 0.0
    %1558 = vmatpush1.msra.mxu0 %v1409
    %1559 = vmatprep.subr.mxu0 0.0
    %1560 = vmatpush1.msra.mxu0 %v1410
    %1561 = vmatprep.subr.mxu0 0.0
    %1562 = vmatpush1.msra.mxu0 0.0
    %1563 = vmatprep.subr.mxu0 0.0
    %1564 = vmatpush1.msra.mxu0 0.0
    %1565 = vmatprep.subr.mxu0 0.0
    %1566 = vmatpush1.msra.mxu0 0.0
    %1567 = vmatprep.subr.mxu0 0.0
    %1568 = vmatpush1.msra.mxu0 0.0
    %1569 = vmatprep.subr.mxu0 0.0
    %1570 = vmatpush1.msra.mxu0 0.0
    %1571 = vmatprep.subr.mxu0 0.0
    %1572 = vmatpush1.msra.mxu0 0.0
    %1573 = vmatprep.subr.mxu0 0.0
    %1574 = vmatpush1.msra.mxu0 0.0
    %1575 = vmatprep.subr.mxu0 0.0
    %1576 = vmatpush1.msra.mxu0 0.0
    %1577 = vmatprep.subr.mxu0 0.0
    %1578 = vmatpush1.msra.mxu0 0.0
    %1579 = vmatprep.subr.mxu0 0.0
    %1580 = vmatpush1.msra.mxu0 0.0
    %1581 = vmatprep.subr.mxu0 0.0
    %1582 = vmatpush1.msra.mxu0 0.0
    %1583 = vmatprep.subr.mxu0 0.0
    %1584 = vmatpush1.msra.mxu0 0.0
    %1585 = vmatprep.subr.mxu0 0.0
    %1586 = vmatpush1.msra.mxu0 0.0
    %1587 = vmatprep.subr.mxu0 0.0
    %1588 = vmatpush1.msra.mxu0 0.0
    %1589 = vmatprep.subr.mxu0 0.0
    %1590 = vmatpush1.msra.mxu0 0.0
    %1591 = vmatprep.subr.mxu0 0.0
    %1592 = vmatpush1.msra.mxu0 0.0
    %1593 = vmatprep.subr.mxu0 0.0
    %1594 = vmatpush1.msra.mxu0 0.0
    %1595 = vmatprep.subr.mxu0 0.0
    %1596 = vmatpush1.msra.mxu0 0.0
    %1597 = vmatprep.subr.mxu0 0.0
    %1598 = vmatpush1.msra.mxu0 0.0
    %1599 = vmatprep.subr.mxu0 0.0
    %1600 = vmatpush1.msra.mxu0 0.0
    %1601 = vmatprep.subr.mxu0 0.0
    %1602 = vmatpush1.msra.mxu0 0.0
    %1603 = vmatprep.subr.mxu0 0.0
    %1604 = vmatpush1.msra.mxu0 0.0
    %1605 = vmatprep.subr.mxu0 0.0
    %1606 = vmatpush1.msra.mxu0 0.0
    %1607 = vmatprep.subr.mxu0 0.0
    %1608 = vmatpush1.msra.mxu0 0.0
    %1609 = vmatprep.subr.mxu0 0.0
    %1610 = vmatpush1.msra.mxu0 0.0
    %1611 = vmatprep.subr.mxu0 0.0
    %1612 = vmatpush1.msra.mxu0 0.0
    %1613 = vmatprep.subr.mxu0 0.0
    %1614 = vmatpush1.msra.mxu0 0.0
    %1615 = vmatprep.subr.mxu0 0.0
    %1616 = vmatpush1.msra.mxu0 0.0
    %1617 = vmatprep.mubr.f32.mxu0 0.0
    %1618 = vmatmul.mubr.f32.gmra.mrb[0].mxu0 %v1542
    %v1619 = vpop.f32.mrb[0].mxu0
    %v1620 = vadd.f32 %v1523, %v1619
    %v1621 = vpop.f32.mrb[0].mxu0
    %1622 = vmatprep.mubr.f32.mxu0 0.0
    %1623 = vmatmul.mubr.f32.gmra.mrb[0].mxu0 %v1545
    %v1624 = vpop.f32.mrb[0].mxu0
    %v1625 = vadd.f32 %v1528, %v1624
    %v1626 = vpop.f32.mrb[0].mxu0
    %1627 = vmatprep.mubr.f32.mxu0 0.0
    %1628 = vmatmul.mubr.f32.gmra.mrb[0].mxu0 %v1548
    %v1629 = vpop.f32.mrb[0].mxu0
    %v1630 = vadd.f32 %v1533, %v1629
    %v1631 = vpop.f32.mrb[0].mxu0
    %1632 = vmatprep.mubr.f32.mxu0 0.0
    %1633 = vmatmul.mubr.f32.gmra.mrb[0].mxu0 %v1551
    %v1634 = vpop.f32.mrb[0].mxu0
    %v1635 = vadd.f32 %v1538, %v1634
    %v1636 = vpop.f32.mrb[0].mxu0
    %1637 = vdwg.mxu0
    %v1639 = vsel %vm140, %v1440, 0
    %v1642 = vsel %vm140, %v1441, 0
    %v1645 = vsel %vm140, %v1442, 0
    %v1648 = vsel %vm140, %v1443, 0
    %1650 = vmatprep.subr.mxu0 0.0
    %1651 = vmatpush1.msra.mxu0 %v1415
    %1652 = vmatprep.subr.mxu0 0.0
    %1653 = vmatpush1.msra.mxu0 %v1416
    %1654 = vmatprep.subr.mxu0 0.0
    %1655 = vmatpush1.msra.mxu0 %v1417
    %1656 = vmatprep.subr.mxu0 0.0
    %1657 = vmatpush1.msra.mxu0 %v1418
    %1658 = vmatprep.subr.mxu0 0.0
    %1659 = vmatpush1.msra.mxu0 0.0
    %1660 = vmatprep.subr.mxu0 0.0
    %1661 = vmatpush1.msra.mxu0 0.0
    %1662 = vmatprep.subr.mxu0 0.0
    %1663 = vmatpush1.msra.mxu0 0.0
    %1664 = vmatprep.subr.mxu0 0.0
    %1665 = vmatpush1.msra.mxu0 0.0
    %1666 = vmatprep.subr.mxu0 0.0
    %1667 = vmatpush1.msra.mxu0 0.0
    %1668 = vmatprep.subr.mxu0 0.0
    %1669 = vmatpush1.msra.mxu0 0.0
    %1670 = vmatprep.subr.mxu0 0.0
    %1671 = vmatpush1.msra.mxu0 0.0
    %1672 = vmatprep.subr.mxu0 0.0
    %1673 = vmatpush1.msra.mxu0 0.0
    %1674 = vmatprep.subr.mxu0 0.0
    %1675 = vmatpush1.msra.mxu0 0.0
    %1676 = vmatprep.subr.mxu0 0.0
    %1677 = vmatpush1.msra.mxu0 0.0
    %1678 = vmatprep.subr.mxu0 0.0
    %1679 = vmatpush1.msra.mxu0 0.0
    %1680 = vmatprep.subr.mxu0 0.0
    %1681 = vmatpush1.msra.mxu0 0.0
    %1682 = vmatprep.subr.mxu0 0.0
    %1683 = vmatpush1.msra.mxu0 0.0
    %1684 = vmatprep.subr.mxu0 0.0
    %1685 = vmatpush1.msra.mxu0 0.0
    %1686 = vmatprep.subr.mxu0 0.0
    %1687 = vmatpush1.msra.mxu0 0.0
    %1688 = vmatprep.subr.mxu0 0.0
    %1689 = vmatpush1.msra.mxu0 0.0
    %1690 = vmatprep.subr.mxu0 0.0
    %1691 = vmatpush1.msra.mxu0 0.0
    %1692 = vmatprep.subr.mxu0 0.0
    %1693 = vmatpush1.msra.mxu0 0.0
    %1694 = vmatprep.subr.mxu0 0.0
    %1695 = vmatpush1.msra.mxu0 0.0
    %1696 = vmatprep.subr.mxu0 0.0
    %1697 = vmatpush1.msra.mxu0 0.0
    %1698 = vmatprep.subr.mxu0 0.0
    %1699 = vmatpush1.msra.mxu0 0.0
    %1700 = vmatprep.subr.mxu0 0.0
    %1701 = vmatpush1.msra.mxu0 0.0
    %1702 = vmatprep.subr.mxu0 0.0
    %1703 = vmatpush1.msra.mxu0 0.0
    %1704 = vmatprep.subr.mxu0 0.0
    %1705 = vmatpush1.msra.mxu0 0.0
    %1706 = vmatprep.subr.mxu0 0.0
    %1707 = vmatpush1.msra.mxu0 0.0
    %1708 = vmatprep.subr.mxu0 0.0
    %1709 = vmatpush1.msra.mxu0 0.0
    %1710 = vmatprep.subr.mxu0 0.0
    %1711 = vmatpush1.msra.mxu0 0.0
    %1712 = vmatprep.subr.mxu0 0.0
    %1713 = vmatpush1.msra.mxu0 0.0
    %1714 = vmatprep.mubr.f32.mxu0 0.0
    %1715 = vmatmul.mubr.f32.gmra.mrb[0].mxu0 %v1639
    %v1716 = vpop.f32.mrb[0].mxu0
    %v1717 = vadd.f32 0.0, %v1716
    %v1718 = vpop.f32.mrb[0].mxu0
    %1719 = vmatprep.mubr.f32.mxu0 0.0
    %1720 = vmatmul.mubr.f32.gmra.mrb[0].mxu0 %v1642
    %v1721 = vpop.f32.mrb[0].mxu0
    %v1722 = vadd.f32 0.0, %v1721
    %v1723 = vpop.f32.mrb[0].mxu0
    %1724 = vmatprep.mubr.f32.mxu0 0.0
    %1725 = vmatmul.mubr.f32.gmra.mrb[0].mxu0 %v1645
    %v1726 = vpop.f32.mrb[0].mxu0
    %v1727 = vadd.f32 0.0, %v1726
    %v1728 = vpop.f32.mrb[0].mxu0
    %1729 = vmatprep.mubr.f32.mxu0 0.0
    %1730 = vmatmul.mubr.f32.gmra.mrb[0].mxu0 %v1648
    %v1731 = vpop.f32.mrb[0].mxu0
    %v1732 = vadd.f32 0.0, %v1731
    %v1733 = vpop.f32.mrb[0].mxu0
    %1734 = vdwg.mxu0
    %v1735 = vadd.f32 %v1620, %v1717
    %v1736 = vadd.f32 %v1625, %v1722
    %v1737 = vadd.f32 %v1630, %v1727
    %v1738 = vadd.f32 %v1635, %v1732
    %v1740 = vlaneseq
    %v1741 = vshrl.u32 %v1740, 7
    %v1742 = vsub.s32 0, %v1741
    %v1743 = vrot.slane %v1419, %v1742
    %v1745 = vadd.f32 %v1735, %v1743
    %v1746 = vadd.f32 %v1736, %v1743
    %v1747 = vadd.f32 %v1737, %v1743
    %v1748 = vadd.f32 %v1738, %v1743
    %v1749 = vld [vmem:[#allocation13] sm:$0xff]
    %v1750 = vld [vmem:[#allocation13 + $0x8] sm:$0xff]
    %v1751 = vld [vmem:[#allocation13 + $0x10] sm:$0xff]
    %v1752 = vld [vmem:[#allocation13 + $0x18] sm:$0xff]
    %v1753 = vld [vmem:[%s16] sm:$0x1]
    %v1755 = vlaneseq
    %v1756 = vshrl.u32 %v1755, 7
    %v1757 = vsub.s32 0, %v1756
    %v1758 = vrot.slane %v1753, %v1757
    %v1761 = vsel %vm140, %v1745, 0
    %v1764 = vsel %vm140, %v1746, 0
    %v1767 = vsel %vm140, %v1747, 0
    %v1770 = vsel %vm140, %v1748, 0
    %1772 = vmatprep.subr.mxu0 0.0
    %1773 = vmatpush1.msra.mxu0 %v1749
    %1774 = vmatprep.subr.mxu0 0.0
    %1775 = vmatpush1.msra.mxu0 %v1750
    %1776 = vmatprep.subr.mxu0 0.0
    %1777 = vmatpush1.msra.mxu0 %v1751
    %1778 = vmatprep.subr.mxu0 0.0
    %1779 = vmatpush1.msra.mxu0 %v1752
    %1780 = vmatprep.subr.mxu0 0.0
    %1781 = vmatpush1.msra.mxu0 0.0
    %1782 = vmatprep.subr.mxu0 0.0
    %1783 = vmatpush1.msra.mxu0 0.0
    %1784 = vmatprep.subr.mxu0 0.0
    %1785 = vmatpush1.msra.mxu0 0.0
    %1786 = vmatprep.subr.mxu0 0.0
    %1787 = vmatpush1.msra.mxu0 0.0
    %1788 = vmatprep.subr.mxu0 0.0
    %1789 = vmatpush1.msra.mxu0 0.0
    %1790 = vmatprep.subr.mxu0 0.0
    %1791 = vmatpush1.msra.mxu0 0.0
    %1792 = vmatprep.subr.mxu0 0.0
    %1793 = vmatpush1.msra.mxu0 0.0
    %1794 = vmatprep.subr.mxu0 0.0
    %1795 = vmatpush1.msra.mxu0 0.0
    %1796 = vmatprep.subr.mxu0 0.0
    %1797 = vmatpush1.msra.mxu0 0.0
    %1798 = vmatprep.subr.mxu0 0.0
    %1799 = vmatpush1.msra.mxu0 0.0
    %1800 = vmatprep.subr.mxu0 0.0
    %1801 = vmatpush1.msra.mxu0 0.0
    %1802 = vmatprep.subr.mxu0 0.0
    %1803 = vmatpush1.msra.mxu0 0.0
    %1804 = vmatprep.subr.mxu0 0.0
    %1805 = vmatpush1.msra.mxu0 0.0
    %1806 = vmatprep.subr.mxu0 0.0
    %1807 = vmatpush1.msra.mxu0 0.0
    %1808 = vmatprep.subr.mxu0 0.0
    %1809 = vmatpush1.msra.mxu0 0.0
    %1810 = vmatprep.subr.mxu0 0.0
    %1811 = vmatpush1.msra.mxu0 0.0
    %1812 = vmatprep.subr.mxu0 0.0
    %1813 = vmatpush1.msra.mxu0 0.0
    %1814 = vmatprep.subr.mxu0 0.0
    %1815 = vmatpush1.msra.mxu0 0.0
    %1816 = vmatprep.subr.mxu0 0.0
    %1817 = vmatpush1.msra.mxu0 0.0
    %1818 = vmatprep.subr.mxu0 0.0
    %1819 = vmatpush1.msra.mxu0 0.0
    %1820 = vmatprep.subr.mxu0 0.0
    %1821 = vmatpush1.msra.mxu0 0.0
    %1822 = vmatprep.subr.mxu0 0.0
    %1823 = vmatpush1.msra.mxu0 0.0
    %1824 = vmatprep.subr.mxu0 0.0
    %1825 = vmatpush1.msra.mxu0 0.0
    %1826 = vmatprep.subr.mxu0 0.0
    %1827 = vmatpush1.msra.mxu0 0.0
    %1828 = vmatprep.subr.mxu0 0.0
    %1829 = vmatpush1.msra.mxu0 0.0
    %1830 = vmatprep.subr.mxu0 0.0
    %1831 = vmatpush1.msra.mxu0 0.0
    %1832 = vmatprep.subr.mxu0 0.0
    %1833 = vmatpush1.msra.mxu0 0.0
    %1834 = vmatprep.subr.mxu0 0.0
    %1835 = vmatpush1.msra.mxu0 0.0
    %1836 = vmatprep.mubr.f32.mxu0 0.0
    %1837 = vmatmul.mubr.f32.gmra.mrb[0].mxu0 %v1761
    %v1838 = vpop.f32.mrb[0].mxu0
    %v1839 = vadd.f32 %v1758, %v1838
    %v1840 = vpop.f32.mrb[0].mxu0
    %1841 = vmatprep.mubr.f32.mxu0 0.0
    %1842 = vmatmul.mubr.f32.gmra.mrb[0].mxu0 %v1764
    %v1843 = vpop.f32.mrb[0].mxu0
    %v1844 = vadd.f32 %v1758, %v1843
    %v1845 = vpop.f32.mrb[0].mxu0
    %1846 = vmatprep.mubr.f32.mxu0 0.0
    %1847 = vmatmul.mubr.f32.gmra.mrb[0].mxu0 %v1767
    %v1848 = vpop.f32.mrb[0].mxu0
    %v1849 = vadd.f32 %v1758, %v1848
    %v1850 = vpop.f32.mrb[0].mxu0
    %1851 = vmatprep.mubr.f32.mxu0 0.0
    %1852 = vmatmul.mubr.f32.gmra.mrb[0].mxu0 %v1770
    %v1853 = vpop.f32.mrb[0].mxu0
    %v1854 = vadd.f32 %v1758, %v1853
    %v1855 = vpop.f32.mrb[0].mxu0
    %1856 = vdwg.mxu0
    %1857 = vst [vmem:[#allocation14] sm:$0xff] %v1839
    %1858 = vst [vmem:[#allocation14 + $0x8] sm:$0xff] %v1844
    %1859 = vst [vmem:[#allocation14 + $0x10] sm:$0xff] %v1849
    %1860 = vst [vmem:[#allocation14 + $0x18] sm:$0xff] %v1854
    // Predicated region
    $region86: #{tpu_custom_call.1} parent=1 // pred_check
      _
    $region87: #{tpu_custom_call.1} parent=1 // pred_check_branch
      %1862 = sbr.rel (0) target = $region89
    $region88: #{tpu_custom_call.1} parent=1 // pred_region
      %s1864 = ssub.s32 512, 512
      %1865 = vsyncadd [#allocation7], %s1864
      %s1866 = sshll.u32 [#allocation14], 4
      %s1867 = int_to_ptr.vmem [resolvable:$true] %s1866
      %1872 = dma.vmem_to_hbm [thread:$0]  %s1867, 512, %s17, [#allocation7], 128, 128, 8
    $region89: #{tpu_custom_call.1} parent=1 // pred_fallthru
      _
    // Predicated region
    $region90: #{tpu_custom_call.1} parent=1 // pred_check
      _
    $region91: #{tpu_custom_call.1} parent=1 // pred_check_branch
      %1874 = sbr.rel (0) target = $region93
    $region92: #{tpu_custom_call.1} parent=1 // pred_region
      %1875 = dma.done [#allocation7], 512
    $region93: #{tpu_custom_call.1} parent=1 // pred_fallthru
      _
    %1876 = vsyncpa [#allocation6], 1
    %1877 = vsyncpa [#allocation9], 1
    %1878 = vsyncpa [#allocation12], 1
    %1879 = vsyncpa [#allocation7], 1

</llo_original>
